<compile_context>
chip_gen: v7x
topology: tpu7x:2x2x1
jax: 0.10.0
libtpu: 0.0.40
codegen_flags: <defaults>
</compile_context>

<pallas_src>
import functools

import jax
import jax.numpy as jnp
from jax.experimental import pallas as pl
from jax.experimental.pallas import tpu as pltpu

LANE = 128  # TPU lane width: feature dims are padded to multiples of this.


def _round_up(x, m):
    return (x + m - 1) // m * m


def _pad2d(x, rows, cols):
    return jnp.pad(x, ((0, rows - x.shape[0]), (0, cols - x.shape[1])))


def _tpu_budget():
    """Best-effort per-generation (vmem_limit_bytes, tile_rows)."""
    vmem_cap = 64 * 1024 * 1024  # conservative default: v7x physical VMEM per TC
    try:
        info = pltpu.get_tpu_info()
        cap = getattr(info, "vmem_capacity_bytes", None)
        if cap:
            vmem_cap = int(cap)
    except Exception:
        pass
    if vmem_cap >= 100 * 1024 * 1024:
        # v5e / v6e (128 MiB VMEM): bigger scoped limit + 256-row tiles.
        # TODO(synk): v5e would prefer tile_rows=128 + pl.Buffered(3) on the n2n
        # spec, but TpuInfo does not expose the chip generation portably here.
        return 96 * 1024 * 1024, 256
    # v7x: 64 MiB physical VMEM per TensorCore.
    return 48 * 1024 * 1024, 128


def _pick_tile_k(n_pad, lat_p, out_p, tile_rows, vmem_limit):
    """K-tile for the iteration kernels.  Prefer tile_k == n_pad (resident cur)."""
    budget = int(vmem_limit * 0.7)

    def fits(tk):
        b = (2 * tile_rows * tk                    # n2n int8 block, double buffered
             + 2 * tk * lat_p * 2                  # cur bf16 block, double buffered
             + 2 * tile_rows * lat_p * 4           # input_msg f32 block
             + 2 * lat_p * lat_p * 2               # w_conv
             + 2 * lat_p * out_p * 2               # w_out (fused-output variant)
             + 2 * tile_rows * max(lat_p, out_p) * 4   # output block
             + tile_rows * lat_p * 4)              # f32 accumulator scratch
        return b <= budget

    if fits(n_pad):
        return n_pad
    best, t = LANE, LANE
    while t < n_pad:
        if n_pad % t == 0 and fits(t):
            best = t
        t += LANE
    return best


# --------------------------------------------------------------------------- #
# Kernels
# --------------------------------------------------------------------------- #
def _fused_kernel(node_feat_ref, edge_lin_ref, e2n_ref, n2n_ref,
                  w_n2l_ref, b_n2l_ref, w_conv_ref, b_conv_ref,
                  w_out_ref, b_out_ref, out_ref, *, max_lv):
    """Whole forward pass in one call (small graphs: everything VMEM-resident)."""
    f32, bf16 = jnp.float32, jnp.bfloat16
    node_lin = jnp.dot(node_feat_ref[...], w_n2l_ref[...],
                       preferred_element_type=f32) + b_n2l_ref[...]
    e2npool = jnp.dot(e2n_ref[...].astype(bf16), edge_lin_ref[...],
                      preferred_element_type=f32)
    msg = node_lin + e2npool                       # f32, reused every level
    cur = jnp.maximum(msg, 0.0).astype(bf16)
    # Adjacency upcast int8 -> bf16 once; reused across all (unrolled) levels.
    n2n = n2n_ref[...].astype(bf16)
    w_conv = w_conv_ref[...]
    b_conv = b_conv_ref[...]
    for _ in range(max_lv):                        # static trip count -> unrolled
        n2npool = jnp.dot(n2n, cur, preferred_element_type=f32)
        node_linear = jnp.dot(n2npool.astype(bf16), w_conv,
                              preferred_element_type=f32) + b_conv
        cur = jnp.maximum(node_linear + msg, 0.0).astype(bf16)
    out_lin = jnp.dot(cur, w_out_ref[...], preferred_element_type=f32) + b_out_ref[...]
    out_ref[...] = jnp.maximum(out_lin, 0.0)       # relu(relu(x)) == relu(x)


def _init_kernel(node_feat_ref, e2n_ref, edge_lin_ref, w_n2l_ref, b_n2l_ref,
                 msg_ref, cur_ref):
    f32, bf16 = jnp.float32, jnp.bfloat16
    node_lin = jnp.dot(node_feat_ref[...], w_n2l_ref[...],
                       preferred_element_type=f32) + b_n2l_ref[...]
    e2npool = jnp.dot(e2n_ref[...].astype(bf16), edge_lin_ref[...],
                      preferred_element_type=f32)
    msg = node_lin + e2npool
    msg_ref[...] = msg                                       # f32, reused every level
    cur_ref[...] = jnp.maximum(msg, 0.0).astype(cur_ref.dtype)


def _iter_kernel(n2n_ref, cur_ref, msg_ref, w_conv_ref, b_conv_ref,
                 new_cur_ref, acc_ref):
    """One mean-field level, K-tiled over the n2n columns / cur rows."""
    f32, bf16 = jnp.float32, jnp.bfloat16
    k = pl.program_id(1)

    @pl.when(k == 0)
    def _():
        acc_ref[...] = jnp.zeros_like(acc_ref)

    acc_ref[...] += jnp.dot(n2n_ref[...].astype(bf16), cur_ref[...],
                            preferred_element_type=f32)

    @pl.when(k == pl.num_programs(1) - 1)
    def _():
        # NOTE: n2npool cast to bf16 before w_conv matches the stated precision
        # policy; keep it f32 if tracking the fp32 PyTorch module more tightly.
        node_linear = jnp.dot(acc_ref[...].astype(bf16), w_conv_ref[...],
                              preferred_element_type=f32) + b_conv_ref[...]
        new_cur_ref[...] = jnp.maximum(node_linear + msg_ref[...],
                                       0.0).astype(new_cur_ref.dtype)


def _iter_out_kernel(n2n_ref, cur_ref, msg_ref, w_conv_ref, b_conv_ref,
                     w_out_ref, b_out_ref, out_ref, acc_ref):
    """Last mean-field level fused with the output projection."""
    f32, bf16 = jnp.float32, jnp.bfloat16
    k = pl.program_id(1)

    @pl.when(k == 0)
    def _():
        acc_ref[...] = jnp.zeros_like(acc_ref)

    acc_ref[...] += jnp.dot(n2n_ref[...].astype(bf16), cur_ref[...],
                            preferred_element_type=f32)

    @pl.when(k == pl.num_programs(1) - 1)
    def _():
        node_linear = jnp.dot(acc_ref[...].astype(bf16), w_conv_ref[...],
                              preferred_element_type=f32) + b_conv_ref[...]
        new_cur = jnp.maximum(node_linear + msg_ref[...], 0.0).astype(bf16)
        out_lin = jnp.dot(new_cur, w_out_ref[...],
                          preferred_element_type=f32) + b_out_ref[...]
        out_ref[...] = jnp.maximum(out_lin, 0.0)   # relu(relu(x)) == relu(x)


def _out_kernel(cur_ref, w_out_ref, b_out_ref, out_ref):
    """Output projection only (used when max_lv == 0)."""
    out_lin = jnp.dot(cur_ref[...], w_out_ref[...],
                      preferred_element_type=jnp.float32) + b_out_ref[...]
    out_ref[...] = jnp.maximum(out_lin, 0.0)


# --------------------------------------------------------------------------- #
# Wrapper
# --------------------------------------------------------------------------- #
def embed_mean_field(node_feat, edge_feat, n2n, e2n, params, *, max_lv=3,
                     path="auto", tile_rows=None):
    f32, bf16, i8 = jnp.float32, jnp.bfloat16, jnp.int8
    n_nodes, n_node_feats = node_feat.shape
    n_edges, _ = edge_feat.shape
    latent_dim = params["w_conv"].shape[1]
    output_dim = params["w_out"].shape[1]

    vmem_limit, default_tile_rows = _tpu_budget()
    tile_rows = default_tile_rows if tile_rows is None else tile_rows

    lat_p = _round_up(latent_dim, LANE)
    out_p = _round_up(output_dim, LANE)
    n_pad = _round_up(n_nodes, tile_rows)
    e_pad = _round_up(n_edges, LANE)
    n_tiles = n_pad // tile_rows

    # ---- pad params to lane-dense shapes (zero padding is exact) ----
    w_n2l = _pad2d(params["w_n2l"], n_node_feats, lat_p).astype(bf16)
    b_n2l = _pad2d(params["b_n2l"], 1, lat_p).astype(f32)
    w_conv = _pad2d(params["w_conv"], lat_p, lat_p).astype(bf16)
    b_conv = _pad2d(params["b_conv"], 1, lat_p).astype(f32)
    w_out = _pad2d(params["w_out"], lat_p, out_p).astype(bf16)
    b_out = _pad2d(params["b_out"], 1, out_p).astype(f32)

    # ---- hoisted edge linear: tiny one-shot XLA matmul, then zero-padded ----
    edge_lin = (jnp.dot(edge_feat.astype(bf16), params["w_e2l"].astype(bf16),
                        preferred_element_type=f32) + params["b_e2l"]).astype(bf16)
    edge_lin = _pad2d(edge_lin, e_pad, lat_p)       # padded rows are exact zeros

    # ---- data: adjacency as int8 (0/1 exact, half the HBM bytes of bf16) ----
    node_feat_p = _pad2d(node_feat, n_pad, n_node_feats).astype(bf16)
    n2n_i8 = _pad2d(n2n, n_pad, n_pad).astype(i8)
    e2n_i8 = _pad2d(e2n, n_pad, e_pad).astype(i8)

    # ---- fused small-graph fast path decision ----
    fused_bytes = (3 * n_pad * n_pad               # n2n int8 + bf16 upcast temp
                   + 3 * n_pad * e_pad             # e2n int8 + bf16 upcast temp
                   + n_pad * lat_p * 10            # msg f32 + cur bf16 + f32 temps
                   + n_pad * out_p * 4
                   + e_pad * lat_p * 2
                   + node_feat_p.size * 2
                   + 2 * lat_p * lat_p + 2 * lat_p * out_p)
    use_fused = fused_bytes <= vmem_limit // 2
    if path == "fused":
        use_fused = True
    elif path == "tiled":
        use_fused = False

    # ======================= fused single-call path ========================= #
    if use_fused:
        fused_cost = pl.CostEstimate(
            flops=int(2 * (n_pad * n_node_feats * lat_p + n_pad * e_pad * lat_p
                           + max_lv * (n_pad * n_pad * lat_p + n_pad * lat_p * lat_p)
                           + n_pad * lat_p * out_p)),
            transcendentals=0,
            bytes_accessed=int(fused_bytes))

        def full(shape):
            return pl.BlockSpec(shape, lambda i, _s=shape: (0,) * len(_s))

        out_padded = pl.pallas_call(
            functools.partial(_fused_kernel, max_lv=max_lv),
            grid=(1,),
            in_specs=[full(node_feat_p.shape), full(edge_lin.shape),
                      full(e2n_i8.shape), full(n2n_i8.shape),
                      full(w_n2l.shape), full(b_n2l.shape),
                      full(w_conv.shape), full(b_conv.shape),
                      full(w_out.shape), full(b_out.shape)],
            out_specs=full((n_pad, out_p)),
            out_shape=jax.ShapeDtypeStruct((n_pad, out_p), f32),
            compiler_params=pltpu.CompilerParams(
                dimension_semantics=("arbitrary",),
                vmem_limit_bytes=vmem_limit),
            cost_estimate=fused_cost,
        )(node_feat_p, edge_lin, e2n_i8, n2n_i8, w_n2l, b_n2l,
          w_conv, b_conv, w_out, b_out)
        return out_padded[:n_nodes, :output_dim]

    # =========================== tiled path ================================= #
    cparams_1d = pltpu.CompilerParams(dimension_semantics=("parallel",),
                                      vmem_limit_bytes=vmem_limit)

    # ---- stage 1: input message (node linear + pooled edge linear) ----
    # TODO(synk): for very large edge counts the (tile_rows, e_pad) int8 block
    # should itself be K-tiled like stage 2.
    init_cost = pl.CostEstimate(
        flops=int(2 * (n_pad * n_node_feats * lat_p + n_pad * e_pad * lat_p)),
        transcendentals=0,
        bytes_accessed=int(node_feat_p.size * 2 + n_pad * e_pad
                           + e_pad * lat_p * 2 + n_pad * lat_p * 6))
    input_msg, cur = pl.pallas_call(
        _init_kernel,
        grid=(n_tiles,),
        in_specs=[
            pl.BlockSpec((tile_rows, n_node_feats), lambda r: (r, 0)),  # node_feat tile
            pl.BlockSpec((tile_rows, e_pad), lambda r: (r, 0)),         # e2n int8 tile
            pl.BlockSpec((e_pad, lat_p), lambda r: (0, 0)),             # edge_lin (resident)
            pl.BlockSpec((n_node_feats, lat_p), lambda r: (0, 0)),      # w_n2l
            pl.BlockSpec((1, lat_p), lambda r: (0, 0)),                 # b_n2l
        ],
        out_specs=[
            pl.BlockSpec((tile_rows, lat_p), lambda r: (r, 0)),         # input_message (f32)
            pl.BlockSpec((tile_rows, lat_p), lambda r: (r, 0)),         # cur_message (bf16)
        ],
        out_shape=[jax.ShapeDtypeStruct((n_pad, lat_p), f32),
                   jax.ShapeDtypeStruct((n_pad, lat_p), bf16)],
        compiler_params=cparams_1d,
        cost_estimate=init_cost,
    )(node_feat_p, e2n_i8, edge_lin, w_n2l, b_n2l)

    if max_lv == 0:
        out_padded = pl.pallas_call(
            _out_kernel,
            grid=(n_tiles,),
            in_specs=[pl.BlockSpec((tile_rows, lat_p), lambda r: (r, 0)),
                      pl.BlockSpec((lat_p, out_p), lambda r: (0, 0)),
                      pl.BlockSpec((1, out_p), lambda r: (0, 0))],
            out_specs=pl.BlockSpec((tile_rows, out_p), lambda r: (r, 0)),
            out_shape=jax.ShapeDtypeStruct((n_pad, out_p), f32),
            compiler_params=cparams_1d,
        )(cur, w_out, b_out)
        return out_padded[:n_nodes, :output_dim]

    # ---- stage 2: mean-field levels (row tiles x K tiles) ----
    tile_k = _pick_tile_k(n_pad, lat_p, out_p, tile_rows, vmem_limit)
    k_tiles = n_pad // tile_k

    cparams_2d = pltpu.CompilerParams(
        dimension_semantics=("parallel", "arbitrary"),
        vmem_limit_bytes=vmem_limit)

    iter_in_specs = [
        pl.BlockSpec((tile_rows, tile_k), lambda r, k: (r, k)),   # n2n int8 stream
        pl.BlockSpec((tile_k, lat_p), lambda r, k: (k, 0)),       # cur (resident if k_tiles==1)
        pl.BlockSpec((tile_rows, lat_p), lambda r, k: (r, 0)),    # input_message tile
        pl.BlockSpec((lat_p, lat_p), lambda r, k: (0, 0)),        # w_conv
        pl.BlockSpec((1, lat_p), lambda r, k: (0, 0)),            # b_conv
    ]
    iter_bytes = int(n_pad * n_pad + n_tiles * k_tiles * tile_k * lat_p * 2
                     + n_pad * lat_p * 6 + lat_p * lat_p * 2 + lat_p * 4)
    iter_cost = pl.CostEstimate(
        flops=int(2 * (n_pad * n_pad * lat_p + n_pad * lat_p * lat_p)),
        transcendentals=0, bytes_accessed=iter_bytes)
    last_cost = pl.CostEstimate(
        flops=int(2 * (n_pad * n_pad * lat_p + n_pad * lat_p * lat_p
                       + n_pad * lat_p * out_p)),
        transcendentals=0,
        bytes_accessed=int(iter_bytes + lat_p * out_p * 2 + n_pad * out_p * 4))

    iter_call = pl.pallas_call(
        _iter_kernel,
        grid=(n_tiles, k_tiles),
        in_specs=iter_in_specs,
        out_specs=pl.BlockSpec((tile_rows, lat_p), lambda r, k: (r, 0)),
        out_shape=jax.ShapeDtypeStruct((n_pad, lat_p), bf16),
        scratch_shapes=[pltpu.VMEM((tile_rows, lat_p), f32)],
        compiler_params=cparams_2d,
        cost_estimate=iter_cost,
    )
    last_call = pl.pallas_call(
        _iter_out_kernel,
        grid=(n_tiles, k_tiles),
        in_specs=iter_in_specs + [
            pl.BlockSpec((lat_p, out_p), lambda r, k: (0, 0)),    # w_out
            pl.BlockSpec((1, out_p), lambda r, k: (0, 0)),        # b_out
        ],
        out_specs=pl.BlockSpec((tile_rows, out_p), lambda r, k: (r, 0)),
        out_shape=jax.ShapeDtypeStruct((n_pad, out_p), f32),
        scratch_shapes=[pltpu.VMEM((tile_rows, lat_p), f32)],
        compiler_params=cparams_2d,
        cost_estimate=last_cost,
    )

    for _ in range(max_lv - 1):        # Jacobi update: one call per level
        cur = iter_call(n2n_i8, cur, input_msg, w_conv, b_conv)
    # last level fused with the output projection
    out_padded = last_call(n2n_i8, cur, input_msg, w_conv, b_conv, w_out, b_out)
    return out_padded[:n_nodes, :output_dim]


# --------------------------------------------------------------------------- #
# Pure-JAX reference (identical precision policy: bf16 operands, f32 accumulate)
# --------------------------------------------------------------------------- #
def _reference(node_feat, edge_feat, n2n, e2n, params, *, max_lv=3):
    f32, bf16 = jnp.float32, jnp.bfloat16
    n2n_b = n2n.astype(jnp.int8).astype(bf16)
    e2n_b = e2n.astype(jnp.int8).astype(bf16)
    edge_lin = (jnp.dot(edge_feat.astype(bf16), params["w_e2l"].astype(bf16),
                        preferred_element_type=f32) + params["b_e2l"]).astype(bf16)
    msg = (jnp.dot(node_feat.astype(bf16), params["w_n2l"].astype(bf16),
                   preferred_element_type=f32) + params["b_n2l"]
           + jnp.dot(e2n_b, edge_lin, preferred_element_type=f32))
    cur = jnp.maximum(msg, 0.0).astype(bf16)
    w_conv = params["w_conv"].astype(bf16)
    for _ in range(max_lv):
        n2npool = jnp.dot(n2n_b, cur, preferred_element_type=f32)
        node_linear = jnp.dot(n2npool.astype(bf16), w_conv,
                              preferred_element_type=f32) + params["b_conv"]
        cur = jnp.maximum(node_linear + msg, 0.0).astype(bf16)
    out_lin = jnp.dot(cur, params["w_out"].astype(bf16),
                      preferred_element_type=f32) + params["b_out"]
    return jnp.maximum(out_lin, 0.0)   # relu(relu(x)) == relu(x)


if __name__ == "__main__":
    # Small synthetic graph (dense 0/1 stand-ins for the sparse n2n_sp / e2n_sp).
    n_nodes, n_edges = 200, 320
    num_node_feats, num_edge_feats = 8, 8
    latent_dim, output_dim, max_lv = 32, 16, 3

    key = jax.random.PRNGKey(0)
    keys = jax.random.split(key, 12)

    def linear_params(kw, kb, in_dim, out_dim):
        scale = 1.0 / jnp.sqrt(jnp.float32(in_dim))
        w = jax.random.uniform(kw, (in_dim, out_dim), jnp.float32, -scale, scale)
        b = jax.random.uniform(kb, (1, out_dim), jnp.float32, -scale, scale)
        return w, b

    w_n2l, b_n2l = linear_params(keys[0], keys[1], num_node_feats, latent_dim)
    w_e2l, b_e2l = linear_params(keys[2], keys[3], num_edge_feats, latent_dim)
    w_conv, b_conv = linear_params(keys[4], keys[5], latent_dim, latent_dim)
    w_out, b_out = linear_params(keys[6], keys[7], latent_dim, output_dim)
    params = dict(w_n2l=w_n2l, b_n2l=b_n2l, w_e2l=w_e2l, b_e2l=b_e2l,
                  w_conv=w_conv, b_conv=b_conv, w_out=w_out, b_out=b_out)

    node_feat = jax.random.normal(keys[8], (n_nodes, num_node_feats), jnp.float32)
    edge_feat = jax.random.normal(keys[9], (n_edges, num_edge_feats), jnp.float32)
    n2n = (jax.random.uniform(keys[10], (n_nodes, n_nodes)) < 0.05).astype(jnp.float32)
    n2n = jnp.maximum(n2n, n2n.T) * (1.0 - jnp.eye(n_nodes, dtype=jnp.float32))
    e2n = (jax.random.uniform(keys[11], (n_nodes, n_edges)) < 0.02).astype(jnp.float32)

    ref = _reference(node_feat, edge_feat, n2n, e2n, params, max_lv=max_lv)

    # Exercise both the fused small-graph fast path and the general tiled path.
    run_fused = jax.jit(functools.partial(embed_mean_field, max_lv=max_lv, path="fused"))
    out_fused = jax.block_until_ready(run_fused(node_feat, edge_feat, n2n, e2n, params))
    assert out_fused.shape == (n_nodes, output_dim)
    assert jnp.allclose(out_fused, ref, atol=1e-3, rtol=1e-3)

    run_tiled = jax.jit(functools.partial(embed_mean_field, max_lv=max_lv, path="tiled"))
    out_tiled = jax.block_until_ready(run_tiled(node_feat, edge_feat, n2n, e2n, params))
    assert out_tiled.shape == (n_nodes, output_dim)
    assert jnp.allclose(out_tiled, ref, atol=1e-3, rtol=1e-3)

    print("KERNEL_OK")
</pallas_src>

<mosaic_0001>
module attributes {stable_mosaic.version = 11 : i64} {
  func.func @_fused_kernel(%arg0: i32, %arg1: memref<256x8xbf16, #tpu.memory_space<vmem>>, %arg2: memref<384x128xbf16, #tpu.memory_space<vmem>>, %arg3: memref<256x384xi8, #tpu.memory_space<vmem>>, %arg4: memref<256x256xi8, #tpu.memory_space<vmem>>, %arg5: memref<8x128xbf16, #tpu.memory_space<vmem>>, %arg6: memref<1x128xf32, #tpu.memory_space<vmem>>, %arg7: memref<128x128xbf16, #tpu.memory_space<vmem>>, %arg8: memref<1x128xf32, #tpu.memory_space<vmem>>, %arg9: memref<128x128xbf16, #tpu.memory_space<vmem>>, %arg10: memref<1x128xf32, #tpu.memory_space<vmem>>, %arg11: memref<256x128xf32, #tpu.memory_space<vmem>>) attributes {dimension_semantics = [#tpu.dimension_semantics<arbitrary>], iteration_bounds = array<i64: 1>, scalar_prefetch = 0 : i64, scratch_operands = 0 : i64, tpu.core_type = #tpu.core_type<tc>, window_params = [{pipeline_mode = #tpu.pipeline_mode<synchronous>, transform_indices = @transform_0, window_bounds = array<i64: 256, 8>}, {pipeline_mode = #tpu.pipeline_mode<synchronous>, transform_indices = @transform_1, window_bounds = array<i64: 384, 128>}, {pipeline_mode = #tpu.pipeline_mode<synchronous>, transform_indices = @transform_2, window_bounds = array<i64: 256, 384>}, {pipeline_mode = #tpu.pipeline_mode<synchronous>, transform_indices = @transform_3, window_bounds = array<i64: 256, 256>}, {pipeline_mode = #tpu.pipeline_mode<synchronous>, transform_indices = @transform_4, window_bounds = array<i64: 8, 128>}, {pipeline_mode = #tpu.pipeline_mode<synchronous>, transform_indices = @transform_5, window_bounds = array<i64: 1, 128>}, {pipeline_mode = #tpu.pipeline_mode<synchronous>, transform_indices = @transform_6, window_bounds = array<i64: 128, 128>}, {pipeline_mode = #tpu.pipeline_mode<synchronous>, transform_indices = @transform_7, window_bounds = array<i64: 1, 128>}, {pipeline_mode = #tpu.pipeline_mode<synchronous>, transform_indices = @transform_8, window_bounds = array<i64: 128, 128>}, {pipeline_mode = #tpu.pipeline_mode<synchronous>, transform_indices = @transform_9, window_bounds = array<i64: 1, 128>}, {pipeline_mode = #tpu.pipeline_mode<synchronous>, transform_indices = @transform_10, window_bounds = array<i64: 256, 128>}]} {
    %c0 = arith.constant 0 : index
    %c0_0 = arith.constant 0 : index
    %0 = vector.load %arg1[%c0, %c0_0] : memref<256x8xbf16, #tpu.memory_space<vmem>>, vector<256x8xbf16>
    %c0_1 = arith.constant 0 : index
    %c0_2 = arith.constant 0 : index
    %1 = vector.load %arg5[%c0_1, %c0_2] : memref<8x128xbf16, #tpu.memory_space<vmem>>, vector<8x128xbf16>
    %cst = arith.constant dense<0.000000e+00> : vector<256x128xf32>
    %2 = tpu.matmul %0, %1, %cst {dimension_numbers = #tpu.dot_dimension_numbers<[1], [0], [0], [1], [0, 0, 1, 1], [], []>} : vector<256x8xbf16>, vector<8x128xbf16>, vector<256x128xf32> -> vector<256x128xf32>
    %c0_3 = arith.constant 0 : index
    %c0_4 = arith.constant 0 : index
    %3 = vector.load %arg6[%c0_3, %c0_4] : memref<1x128xf32, #tpu.memory_space<vmem>>, vector<1x128xf32>
    %4 = vector.broadcast %3 : vector<1x128xf32> to vector<256x128xf32>
    %5 = arith.addf %2, %4 : vector<256x128xf32>
    %c0_5 = arith.constant 0 : index
    %c0_6 = arith.constant 0 : index
    %6 = vector.load %arg3[%c0_5, %c0_6] : memref<256x384xi8, #tpu.memory_space<vmem>>, vector<256x384xi8>
    %7 = arith.sitofp %6 : vector<256x384xi8> to vector<256x384xbf16>
    %c0_7 = arith.constant 0 : index
    %c0_8 = arith.constant 0 : index
    %8 = vector.load %arg2[%c0_7, %c0_8] : memref<384x128xbf16, #tpu.memory_space<vmem>>, vector<384x128xbf16>
    %cst_9 = arith.constant dense<0.000000e+00> : vector<256x128xf32>
    %9 = tpu.matmul %7, %8, %cst_9 {dimension_numbers = #tpu.dot_dimension_numbers<[1], [0], [0], [1], [0, 0, 1, 1], [], []>} : vector<256x384xbf16>, vector<384x128xbf16>, vector<256x128xf32> -> vector<256x128xf32>
    %10 = arith.addf %5, %9 : vector<256x128xf32>
    %cst_10 = arith.constant 0.000000e+00 : f32
    %11 = vector.broadcast %cst_10 : f32 to vector<256x128xf32>
    %12 = arith.maximumf %10, %11 : vector<256x128xf32>
    %13 = arith.truncf %12 : vector<256x128xf32> to vector<256x128xbf16>
    %c0_11 = arith.constant 0 : index
    %c0_12 = arith.constant 0 : index
    %14 = vector.load %arg4[%c0_11, %c0_12] : memref<256x256xi8, #tpu.memory_space<vmem>>, vector<256x256xi8>
    %15 = arith.sitofp %14 : vector<256x256xi8> to vector<256x256xbf16>
    %c0_13 = arith.constant 0 : index
    %c0_14 = arith.constant 0 : index
    %16 = vector.load %arg7[%c0_13, %c0_14] : memref<128x128xbf16, #tpu.memory_space<vmem>>, vector<128x128xbf16>
    %c0_15 = arith.constant 0 : index
    %c0_16 = arith.constant 0 : index
    %17 = vector.load %arg8[%c0_15, %c0_16] : memref<1x128xf32, #tpu.memory_space<vmem>>, vector<1x128xf32>
    %cst_17 = arith.constant dense<0.000000e+00> : vector<256x128xf32>
    %18 = tpu.matmul %15, %13, %cst_17 {dimension_numbers = #tpu.dot_dimension_numbers<[1], [0], [0], [1], [0, 0, 1, 1], [], []>} : vector<256x256xbf16>, vector<256x128xbf16>, vector<256x128xf32> -> vector<256x128xf32>
    %19 = arith.truncf %18 : vector<256x128xf32> to vector<256x128xbf16>
    %cst_18 = arith.constant dense<0.000000e+00> : vector<256x128xf32>
    %20 = tpu.matmul %19, %16, %cst_18 {dimension_numbers = #tpu.dot_dimension_numbers<[1], [0], [0], [1], [0, 0, 1, 1], [], []>} : vector<256x128xbf16>, vector<128x128xbf16>, vector<256x128xf32> -> vector<256x128xf32>
    %21 = vector.broadcast %17 : vector<1x128xf32> to vector<256x128xf32>
    %22 = arith.addf %20, %21 : vector<256x128xf32>
    %23 = arith.addf %22, %10 : vector<256x128xf32>
    %cst_19 = arith.constant 0.000000e+00 : f32
    %24 = vector.broadcast %cst_19 : f32 to vector<256x128xf32>
    %25 = arith.maximumf %23, %24 : vector<256x128xf32>
    %26 = arith.truncf %25 : vector<256x128xf32> to vector<256x128xbf16>
    %cst_20 = arith.constant dense<0.000000e+00> : vector<256x128xf32>
    %27 = tpu.matmul %15, %26, %cst_20 {dimension_numbers = #tpu.dot_dimension_numbers<[1], [0], [0], [1], [0, 0, 1, 1], [], []>} : vector<256x256xbf16>, vector<256x128xbf16>, vector<256x128xf32> -> vector<256x128xf32>
    %28 = arith.truncf %27 : vector<256x128xf32> to vector<256x128xbf16>
    %cst_21 = arith.constant dense<0.000000e+00> : vector<256x128xf32>
    %29 = tpu.matmul %28, %16, %cst_21 {dimension_numbers = #tpu.dot_dimension_numbers<[1], [0], [0], [1], [0, 0, 1, 1], [], []>} : vector<256x128xbf16>, vector<128x128xbf16>, vector<256x128xf32> -> vector<256x128xf32>
    %30 = vector.broadcast %17 : vector<1x128xf32> to vector<256x128xf32>
    %31 = arith.addf %29, %30 : vector<256x128xf32>
    %32 = arith.addf %31, %10 : vector<256x128xf32>
    %cst_22 = arith.constant 0.000000e+00 : f32
    %33 = vector.broadcast %cst_22 : f32 to vector<256x128xf32>
    %34 = arith.maximumf %32, %33 : vector<256x128xf32>
    %35 = arith.truncf %34 : vector<256x128xf32> to vector<256x128xbf16>
    %cst_23 = arith.constant dense<0.000000e+00> : vector<256x128xf32>
    %36 = tpu.matmul %15, %35, %cst_23 {dimension_numbers = #tpu.dot_dimension_numbers<[1], [0], [0], [1], [0, 0, 1, 1], [], []>} : vector<256x256xbf16>, vector<256x128xbf16>, vector<256x128xf32> -> vector<256x128xf32>
    %37 = arith.truncf %36 : vector<256x128xf32> to vector<256x128xbf16>
    %cst_24 = arith.constant dense<0.000000e+00> : vector<256x128xf32>
    %38 = tpu.matmul %37, %16, %cst_24 {dimension_numbers = #tpu.dot_dimension_numbers<[1], [0], [0], [1], [0, 0, 1, 1], [], []>} : vector<256x128xbf16>, vector<128x128xbf16>, vector<256x128xf32> -> vector<256x128xf32>
    %39 = vector.broadcast %17 : vector<1x128xf32> to vector<256x128xf32>
    %40 = arith.addf %38, %39 : vector<256x128xf32>
    %41 = arith.addf %40, %10 : vector<256x128xf32>
    %cst_25 = arith.constant 0.000000e+00 : f32
    %42 = vector.broadcast %cst_25 : f32 to vector<256x128xf32>
    %43 = arith.maximumf %41, %42 : vector<256x128xf32>
    %44 = arith.truncf %43 : vector<256x128xf32> to vector<256x128xbf16>
    %c0_26 = arith.constant 0 : index
    %c0_27 = arith.constant 0 : index
    %45 = vector.load %arg9[%c0_26, %c0_27] : memref<128x128xbf16, #tpu.memory_space<vmem>>, vector<128x128xbf16>
    %cst_28 = arith.constant dense<0.000000e+00> : vector<256x128xf32>
    %46 = tpu.matmul %44, %45, %cst_28 {dimension_numbers = #tpu.dot_dimension_numbers<[1], [0], [0], [1], [0, 0, 1, 1], [], []>} : vector<256x128xbf16>, vector<128x128xbf16>, vector<256x128xf32> -> vector<256x128xf32>
    %c0_29 = arith.constant 0 : index
    %c0_30 = arith.constant 0 : index
    %47 = vector.load %arg10[%c0_29, %c0_30] : memref<1x128xf32, #tpu.memory_space<vmem>>, vector<1x128xf32>
    %48 = vector.broadcast %47 : vector<1x128xf32> to vector<256x128xf32>
    %49 = arith.addf %46, %48 : vector<256x128xf32>
    %cst_31 = arith.constant 0.000000e+00 : f32
    %50 = vector.broadcast %cst_31 : f32 to vector<256x128xf32>
    %51 = arith.maximumf %49, %50 : vector<256x128xf32>
    %c0_32 = arith.constant 0 : index
    %c0_33 = arith.constant 0 : index
    %52 = vector.load %arg11[%c0_32, %c0_33] : memref<256x128xf32, #tpu.memory_space<vmem>>, vector<256x128xf32>
    tpu.vector_store %arg11[%c0_32, %c0_33], %51 {strides = array<i32>} : memref<256x128xf32, #tpu.memory_space<vmem>>, vector<256x128xf32>,
    return
  }
  func.func @transform_0(%arg0: i32) -> (i32, i32) {
    %c0_i32 = arith.constant 0 : i32
    %c0_i32_0 = arith.constant 0 : i32
    %c0_i32_1 = arith.constant 0 : i32
    return %c0_i32, %c0_i32_0 : i32, i32
  }
  func.func @transform_1(%arg0: i32) -> (i32, i32) {
    %c0_i32 = arith.constant 0 : i32
    %c0_i32_0 = arith.constant 0 : i32
    %c0_i32_1 = arith.constant 0 : i32
    return %c0_i32, %c0_i32_0 : i32, i32
  }
  func.func @transform_2(%arg0: i32) -> (i32, i32) {
    %c0_i32 = arith.constant 0 : i32
    %c0_i32_0 = arith.constant 0 : i32
    %c0_i32_1 = arith.constant 0 : i32
    return %c0_i32, %c0_i32_0 : i32, i32
  }
  func.func @transform_3(%arg0: i32) -> (i32, i32) {
    %c0_i32 = arith.constant 0 : i32
    %c0_i32_0 = arith.constant 0 : i32
    %c0_i32_1 = arith.constant 0 : i32
    return %c0_i32, %c0_i32_0 : i32, i32
  }
  func.func @transform_4(%arg0: i32) -> (i32, i32) {
    %c0_i32 = arith.constant 0 : i32
    %c0_i32_0 = arith.constant 0 : i32
    %c0_i32_1 = arith.constant 0 : i32
    return %c0_i32, %c0_i32_0 : i32, i32
  }
  func.func @transform_5(%arg0: i32) -> (i32, i32) {
    %c0_i32 = arith.constant 0 : i32
    %c0_i32_0 = arith.constant 0 : i32
    %c0_i32_1 = arith.constant 0 : i32
    return %c0_i32, %c0_i32_0 : i32, i32
  }
  func.func @transform_6(%arg0: i32) -> (i32, i32) {
    %c0_i32 = arith.constant 0 : i32
    %c0_i32_0 = arith.constant 0 : i32
    %c0_i32_1 = arith.constant 0 : i32
    return %c0_i32, %c0_i32_0 : i32, i32
  }
  func.func @transform_7(%arg0: i32) -> (i32, i32) {
    %c0_i32 = arith.constant 0 : i32
    %c0_i32_0 = arith.constant 0 : i32
    %c0_i32_1 = arith.constant 0 : i32
    return %c0_i32, %c0_i32_0 : i32, i32
  }
  func.func @transform_8(%arg0: i32) -> (i32, i32) {
    %c0_i32 = arith.constant 0 : i32
    %c0_i32_0 = arith.constant 0 : i32
    %c0_i32_1 = arith.constant 0 : i32
    return %c0_i32, %c0_i32_0 : i32, i32
  }
  func.func @transform_9(%arg0: i32) -> (i32, i32) {
    %c0_i32 = arith.constant 0 : i32
    %c0_i32_0 = arith.constant 0 : i32
    %c0_i32_1 = arith.constant 0 : i32
    return %c0_i32, %c0_i32_0 : i32, i32
  }
  func.func @transform_10(%arg0: i32) -> (i32, i32) {
    %c0_i32 = arith.constant 0 : i32
    %c0_i32_0 = arith.constant 0 : i32
    %c0_i32_1 = arith.constant 0 : i32
    return %c0_i32, %c0_i32_0 : i32, i32
  }
}

</mosaic_0001>

<llo_original>
// kernel: embed_mean_field.1
$region0: #{embed_mean_field.1}
  #allocation0 [shape = 'u32[]', space=smem, size = 0x4, offset = 0x4, fixed_abs, tag = 'smem constant byte address 0x4 - core index']
  #allocation1 [shape = 'u32[144,128]{1,0:T(1,128)}', space=vmem, size = 0x12000, scoped, tag = 'internal scratch']
  %s0 = inlined_call_operand.vmem [shape: bf16[256,8], index: 0, kind: input, shape index: {}]
  %s1 = inlined_call_operand.vmem [shape: bf16[384,128], index: 1, kind: input, shape index: {}]
  %s2 = inlined_call_operand.vmem [shape: s8[256,384], index: 2, kind: input, shape index: {}]
  %s3 = inlined_call_operand.vmem [shape: s8[256,256], index: 3, kind: input, shape index: {}]
  %s4 = inlined_call_operand.vmem [shape: bf16[8,128], index: 4, kind: input, shape index: {}]
  %s5 = inlined_call_operand.vmem [shape: f32[1,128], index: 5, kind: input, shape index: {}]
  %s6 = inlined_call_operand.vmem [shape: bf16[128,128], index: 6, kind: input, shape index: {}]
  %s7 = inlined_call_operand.vmem [shape: f32[1,128], index: 7, kind: input, shape index: {}]
  %s8 = inlined_call_operand.vmem [shape: bf16[128,128], index: 8, kind: input, shape index: {}]
  %s9 = inlined_call_operand.vmem [shape: f32[1,128], index: 9, kind: input, shape index: {}]
  %s10 = inlined_call_operand.vmem [shape: f32[256,128], index: 10, kind: output, shape index: {}]
  %s11 = sld [smem:[#allocation0]]
  $region50: #{embed_mean_field.1} parent=0
    _
  %s13 = ssub.s32 1, %s11
  %s14 = scalar_select 0, %s13, %s11
  // Predicated region
  $region2: #{embed_mean_field.1} parent=0 // pred_check
    _
  $region3: #{embed_mean_field.1} parent=0 // pred_check_branch
    %16 = sbr.rel (0) target = $region5
  $region4: #{embed_mean_field.1} parent=0 // pred_region
    _
  $region5: #{embed_mean_field.1} parent=0 // pred_fallthru
    _
  // Predicated region
  $region6: #{embed_mean_field.1} parent=0 // pred_check
    _
  $region7: #{embed_mean_field.1} parent=0 // pred_check_branch
    %18 = sbr.rel (0) target = $region9
  $region8: #{embed_mean_field.1} parent=0 // pred_region
    _
  $region9: #{embed_mean_field.1} parent=0 // pred_fallthru
    _
  // Predicated region
  $region10: #{embed_mean_field.1} parent=0 // pred_check
    _
  $region11: #{embed_mean_field.1} parent=0 // pred_check_branch
    %20 = sbr.rel (0) target = $region13
  $region12: #{embed_mean_field.1} parent=0 // pred_region
    _
  $region13: #{embed_mean_field.1} parent=0 // pred_fallthru
    _
  // Predicated region
  $region14: #{embed_mean_field.1} parent=0 // pred_check
    _
  $region15: #{embed_mean_field.1} parent=0 // pred_check_branch
    %22 = sbr.rel (0) target = $region17
  $region16: #{embed_mean_field.1} parent=0 // pred_region
    _
  $region17: #{embed_mean_field.1} parent=0 // pred_fallthru
    _
  // Predicated region
  $region18: #{embed_mean_field.1} parent=0 // pred_check
    _
  $region19: #{embed_mean_field.1} parent=0 // pred_check_branch
    %24 = sbr.rel (0) target = $region21
  $region20: #{embed_mean_field.1} parent=0 // pred_region
    _
  $region21: #{embed_mean_field.1} parent=0 // pred_fallthru
    _
  // Predicated region
  $region22: #{embed_mean_field.1} parent=0 // pred_check
    _
  $region23: #{embed_mean_field.1} parent=0 // pred_check_branch
    %26 = sbr.rel (0) target = $region25
  $region24: #{embed_mean_field.1} parent=0 // pred_region
    _
  $region25: #{embed_mean_field.1} parent=0 // pred_fallthru
    _
  // Predicated region
  $region26: #{embed_mean_field.1} parent=0 // pred_check
    _
  $region27: #{embed_mean_field.1} parent=0 // pred_check_branch
    %28 = sbr.rel (0) target = $region29
  $region28: #{embed_mean_field.1} parent=0 // pred_region
    _
  $region29: #{embed_mean_field.1} parent=0 // pred_fallthru
    _
  // Predicated region
  $region30: #{embed_mean_field.1} parent=0 // pred_check
    _
  $region31: #{embed_mean_field.1} parent=0 // pred_check_branch
    %30 = sbr.rel (0) target = $region33
  $region32: #{embed_mean_field.1} parent=0 // pred_region
    _
  $region33: #{embed_mean_field.1} parent=0 // pred_fallthru
    _
  // Predicated region
  $region34: #{embed_mean_field.1} parent=0 // pred_check
    _
  $region35: #{embed_mean_field.1} parent=0 // pred_check_branch
    %32 = sbr.rel (0) target = $region37
  $region36: #{embed_mean_field.1} parent=0 // pred_region
    _
  $region37: #{embed_mean_field.1} parent=0 // pred_fallthru
    _
  // Predicated region
  $region38: #{embed_mean_field.1} parent=0 // pred_check
    _
  $region39: #{embed_mean_field.1} parent=0 // pred_check_branch
    %34 = sbr.rel (0) target = $region41
  $region40: #{embed_mean_field.1} parent=0 // pred_region
    _
  $region41: #{embed_mean_field.1} parent=0 // pred_fallthru
    _
  %v36 = vld [vmem:[%s0] sm:$0xf]
  %v37 = vld [vmem:[%s0 + $0x4] sm:$0xf]
  %v38 = vld [vmem:[%s0 + $0x8] sm:$0xf]
  %v39 = vld [vmem:[%s0 + $0xc] sm:$0xf]
  %v40 = vld [vmem:[%s0 + $0x10] sm:$0xf]
  %v41 = vld [vmem:[%s0 + $0x14] sm:$0xf]
  %v42 = vld [vmem:[%s0 + $0x18] sm:$0xf]
  %v43 = vld [vmem:[%s0 + $0x1c] sm:$0xf]
  %v44 = vld [vmem:[%s0 + $0x20] sm:$0xf]
  %v45 = vld [vmem:[%s0 + $0x24] sm:$0xf]
  %v46 = vld [vmem:[%s0 + $0x28] sm:$0xf]
  %v47 = vld [vmem:[%s0 + $0x2c] sm:$0xf]
  %v48 = vld [vmem:[%s0 + $0x30] sm:$0xf]
  %v49 = vld [vmem:[%s0 + $0x34] sm:$0xf]
  %v50 = vld [vmem:[%s0 + $0x38] sm:$0xf]
  %v51 = vld [vmem:[%s0 + $0x3c] sm:$0xf]
  %v52 = vld [vmem:[%s0 + $0x40] sm:$0xf]
  %v53 = vld [vmem:[%s0 + $0x44] sm:$0xf]
  %v54 = vld [vmem:[%s0 + $0x48] sm:$0xf]
  %v55 = vld [vmem:[%s0 + $0x4c] sm:$0xf]
  %v56 = vld [vmem:[%s0 + $0x50] sm:$0xf]
  %v57 = vld [vmem:[%s0 + $0x54] sm:$0xf]
  %v58 = vld [vmem:[%s0 + $0x58] sm:$0xf]
  %v59 = vld [vmem:[%s0 + $0x5c] sm:$0xf]
  %v60 = vld [vmem:[%s0 + $0x60] sm:$0xf]
  %v61 = vld [vmem:[%s0 + $0x64] sm:$0xf]
  %v62 = vld [vmem:[%s0 + $0x68] sm:$0xf]
  %v63 = vld [vmem:[%s0 + $0x6c] sm:$0xf]
  %v64 = vld [vmem:[%s0 + $0x70] sm:$0xf]
  %v65 = vld [vmem:[%s0 + $0x74] sm:$0xf]
  %v66 = vld [vmem:[%s0 + $0x78] sm:$0xf]
  %v67 = vld [vmem:[%s0 + $0x7c] sm:$0xf]
  %v68 = vld [vmem:[%s4] sm:$0xf]
  %v69 = vld [vmem:[%s5] sm:$0x1]
  %v71 = vlaneseq
  %v72 = vshrl.u32 %v71, 7
  %v73 = vsub.s32 0, %v72
  %v74 = vrot.slane %v69, %v73
  %v108 = vunpack.c.l.b16 %v36
  %v109 = vunpack.c.l.b16 %v37
  %v110 = vunpack.c.l.b16 %v38
  %v111 = vunpack.c.l.b16 %v39
  %v112 = vunpack.c.l.b16 %v40
  %v113 = vunpack.c.l.b16 %v41
  %v114 = vunpack.c.l.b16 %v42
  %v115 = vunpack.c.l.b16 %v43
  %v116 = vunpack.c.l.b16 %v44
  %v117 = vunpack.c.l.b16 %v45
  %v118 = vunpack.c.l.b16 %v46
  %v119 = vunpack.c.l.b16 %v47
  %v120 = vunpack.c.l.b16 %v48
  %v121 = vunpack.c.l.b16 %v49
  %v122 = vunpack.c.l.b16 %v50
  %v123 = vunpack.c.l.b16 %v51
  %v124 = vunpack.c.l.b16 %v52
  %v125 = vunpack.c.l.b16 %v53
  %v126 = vunpack.c.l.b16 %v54
  %v127 = vunpack.c.l.b16 %v55
  %v128 = vunpack.c.l.b16 %v56
  %v129 = vunpack.c.l.b16 %v57
  %v130 = vunpack.c.l.b16 %v58
  %v131 = vunpack.c.l.b16 %v59
  %v132 = vunpack.c.l.b16 %v60
  %v133 = vunpack.c.l.b16 %v61
  %v134 = vunpack.c.l.b16 %v62
  %v135 = vunpack.c.l.b16 %v63
  %v136 = vunpack.c.l.b16 %v64
  %v137 = vunpack.c.l.b16 %v65
  %v138 = vunpack.c.l.b16 %v66
  %v139 = vunpack.c.l.b16 %v67
  %v140 = vpack.c.b16 %v109, %v108
  %v141 = vpack.c.b16 %v111, %v110
  %v142 = vpack.c.b16 %v113, %v112
  %v143 = vpack.c.b16 %v115, %v114
  %v144 = vpack.c.b16 %v117, %v116
  %v145 = vpack.c.b16 %v119, %v118
  %v146 = vpack.c.b16 %v121, %v120
  %v147 = vpack.c.b16 %v123, %v122
  %v148 = vpack.c.b16 %v125, %v124
  %v149 = vpack.c.b16 %v127, %v126
  %v150 = vpack.c.b16 %v129, %v128
  %v151 = vpack.c.b16 %v131, %v130
  %v152 = vpack.c.b16 %v133, %v132
  %v153 = vpack.c.b16 %v135, %v134
  %v154 = vpack.c.b16 %v137, %v136
  %v155 = vpack.c.b16 %v139, %v138
  %vm156 = vcmask 64512
  %v158 = vsel %vm156, %v140, 0
  %v161 = vsel %vm156, %v141, 0
  %v164 = vsel %vm156, %v142, 0
  %v167 = vsel %vm156, %v143, 0
  %v170 = vsel %vm156, %v144, 0
  %v173 = vsel %vm156, %v145, 0
  %v176 = vsel %vm156, %v146, 0
  %v179 = vsel %vm156, %v147, 0
  %v182 = vsel %vm156, %v148, 0
  %v185 = vsel %vm156, %v149, 0
  %v188 = vsel %vm156, %v150, 0
  %v191 = vsel %vm156, %v151, 0
  %v194 = vsel %vm156, %v152, 0
  %v197 = vsel %vm156, %v153, 0
  %v200 = vsel %vm156, %v154, 0
  %v203 = vsel %vm156, %v155, 0
  %vm205 = vcmask 1043456
  %v207 = vsel %vm205, %v68, 0
  %209 = vmatprep.subr.bf16.mxu0 0
  %210 = vmatpush1.bf16.msra.mxu0 %v207
  %211 = vmatprep.subr.bf16.mxu0 0
  %212 = vmatpush1.bf16.msra.mxu0 0
  %213 = vmatprep.subr.bf16.mxu0 0
  %214 = vmatpush1.bf16.msra.mxu0 0
  %215 = vmatprep.subr.bf16.mxu0 0
  %216 = vmatpush1.bf16.msra.mxu0 0
  %217 = vmatprep.subr.bf16.mxu0 0
  %218 = vmatpush1.bf16.msra.mxu0 0
  %219 = vmatprep.subr.bf16.mxu0 0
  %220 = vmatpush1.bf16.msra.mxu0 0
  %221 = vmatprep.subr.bf16.mxu0 0
  %222 = vmatpush1.bf16.msra.mxu0 0
  %223 = vmatprep.subr.bf16.mxu0 0
  %224 = vmatpush1.bf16.msra.mxu0 0
  %225 = vmatprep.subr.bf16.mxu0 0
  %226 = vmatpush1.bf16.msra.mxu0 0
  %227 = vmatprep.subr.bf16.mxu0 0
  %228 = vmatpush1.bf16.msra.mxu0 0
  %229 = vmatprep.subr.bf16.mxu0 0
  %230 = vmatpush1.bf16.msra.mxu0 0
  %231 = vmatprep.subr.bf16.mxu0 0
  %232 = vmatpush1.bf16.msra.mxu0 0
  %233 = vmatprep.subr.bf16.mxu0 0
  %234 = vmatpush1.bf16.msra.mxu0 0
  %235 = vmatprep.subr.bf16.mxu0 0
  %236 = vmatpush1.bf16.msra.mxu0 0
  %237 = vmatprep.subr.bf16.mxu0 0
  %238 = vmatpush1.bf16.msra.mxu0 0
  %239 = vmatprep.subr.bf16.mxu0 0
  %240 = vmatpush1.bf16.msra.mxu0 0
  %241 = vmatprep.mubr.bf16.mxu0 0
  %242 = vmatmul.mubr.bf16.gmra.mrb[0].mxu0 %v158
  %v243 = vpop.f32.mrb[0].mxu0
  %v244 = vadd.f32 %v74, %v243
  %v245 = vpop.f32.mrb[0].mxu0
  %v246 = vpop.f32.mrb[0].mxu0
  %v247 = vadd.f32 %v74, %v246
  %v248 = vpop.f32.mrb[0].mxu0
  %249 = vmatprep.mubr.bf16.mxu0 0
  %250 = vmatmul.mubr.bf16.gmra.mrb[0].mxu0 %v161
  %v251 = vpop.f32.mrb[0].mxu0
  %v252 = vadd.f32 %v74, %v251
  %v253 = vpop.f32.mrb[0].mxu0
  %v254 = vpop.f32.mrb[0].mxu0
  %v255 = vadd.f32 %v74, %v254
  %v256 = vpop.f32.mrb[0].mxu0
  %257 = vmatprep.mubr.bf16.mxu0 0
  %258 = vmatmul.mubr.bf16.gmra.mrb[0].mxu0 %v164
  %v259 = vpop.f32.mrb[0].mxu0
  %v260 = vadd.f32 %v74, %v259
  %v261 = vpop.f32.mrb[0].mxu0
  %v262 = vpop.f32.mrb[0].mxu0
  %v263 = vadd.f32 %v74, %v262
  %v264 = vpop.f32.mrb[0].mxu0
  %265 = vmatprep.mubr.bf16.mxu0 0
  %266 = vmatmul.mubr.bf16.gmra.mrb[0].mxu0 %v167
  %v267 = vpop.f32.mrb[0].mxu0
  %v268 = vadd.f32 %v74, %v267
  %v269 = vpop.f32.mrb[0].mxu0
  %v270 = vpop.f32.mrb[0].mxu0
  %v271 = vadd.f32 %v74, %v270
  %v272 = vpop.f32.mrb[0].mxu0
  %273 = vmatprep.mubr.bf16.mxu0 0
  %274 = vmatmul.mubr.bf16.gmra.mrb[0].mxu0 %v170
  %v275 = vpop.f32.mrb[0].mxu0
  %v276 = vadd.f32 %v74, %v275
  %v277 = vpop.f32.mrb[0].mxu0
  %v278 = vpop.f32.mrb[0].mxu0
  %v279 = vadd.f32 %v74, %v278
  %v280 = vpop.f32.mrb[0].mxu0
  %281 = vmatprep.mubr.bf16.mxu0 0
  %282 = vmatmul.mubr.bf16.gmra.mrb[0].mxu0 %v173
  %v283 = vpop.f32.mrb[0].mxu0
  %v284 = vadd.f32 %v74, %v283
  %v285 = vpop.f32.mrb[0].mxu0
  %v286 = vpop.f32.mrb[0].mxu0
  %v287 = vadd.f32 %v74, %v286
  %v288 = vpop.f32.mrb[0].mxu0
  %289 = vmatprep.mubr.bf16.mxu0 0
  %290 = vmatmul.mubr.bf16.gmra.mrb[0].mxu0 %v176
  %v291 = vpop.f32.mrb[0].mxu0
  %v292 = vadd.f32 %v74, %v291
  %v293 = vpop.f32.mrb[0].mxu0
  %v294 = vpop.f32.mrb[0].mxu0
  %v295 = vadd.f32 %v74, %v294
  %v296 = vpop.f32.mrb[0].mxu0
  %297 = vmatprep.mubr.bf16.mxu0 0
  %298 = vmatmul.mubr.bf16.gmra.mrb[0].mxu0 %v179
  %v299 = vpop.f32.mrb[0].mxu0
  %v300 = vadd.f32 %v74, %v299
  %v301 = vpop.f32.mrb[0].mxu0
  %v302 = vpop.f32.mrb[0].mxu0
  %v303 = vadd.f32 %v74, %v302
  %v304 = vpop.f32.mrb[0].mxu0
  %305 = vmatprep.mubr.bf16.mxu0 0
  %306 = vmatmul.mubr.bf16.gmra.mrb[0].mxu0 %v182
  %v307 = vpop.f32.mrb[0].mxu0
  %v308 = vadd.f32 %v74, %v307
  %v309 = vpop.f32.mrb[0].mxu0
  %v310 = vpop.f32.mrb[0].mxu0
  %v311 = vadd.f32 %v74, %v310
  %v312 = vpop.f32.mrb[0].mxu0
  %313 = vmatprep.mubr.bf16.mxu0 0
  %314 = vmatmul.mubr.bf16.gmra.mrb[0].mxu0 %v185
  %v315 = vpop.f32.mrb[0].mxu0
  %v316 = vadd.f32 %v74, %v315
  %v317 = vpop.f32.mrb[0].mxu0
  %v318 = vpop.f32.mrb[0].mxu0
  %v319 = vadd.f32 %v74, %v318
  %v320 = vpop.f32.mrb[0].mxu0
  %321 = vmatprep.mubr.bf16.mxu0 0
  %322 = vmatmul.mubr.bf16.gmra.mrb[0].mxu0 %v188
  %v323 = vpop.f32.mrb[0].mxu0
  %v324 = vadd.f32 %v74, %v323
  %v325 = vpop.f32.mrb[0].mxu0
  %v326 = vpop.f32.mrb[0].mxu0
  %v327 = vadd.f32 %v74, %v326
  %v328 = vpop.f32.mrb[0].mxu0
  %329 = vmatprep.mubr.bf16.mxu0 0
  %330 = vmatmul.mubr.bf16.gmra.mrb[0].mxu0 %v191
  %v331 = vpop.f32.mrb[0].mxu0
  %v332 = vadd.f32 %v74, %v331
  %v333 = vpop.f32.mrb[0].mxu0
  %v334 = vpop.f32.mrb[0].mxu0
  %v335 = vadd.f32 %v74, %v334
  %v336 = vpop.f32.mrb[0].mxu0
  %337 = vmatprep.mubr.bf16.mxu0 0
  %338 = vmatmul.mubr.bf16.gmra.mrb[0].mxu0 %v194
  %v339 = vpop.f32.mrb[0].mxu0
  %v340 = vadd.f32 %v74, %v339
  %v341 = vpop.f32.mrb[0].mxu0
  %v342 = vpop.f32.mrb[0].mxu0
  %v343 = vadd.f32 %v74, %v342
  %v344 = vpop.f32.mrb[0].mxu0
  %345 = vmatprep.mubr.bf16.mxu0 0
  %346 = vmatmul.mubr.bf16.gmra.mrb[0].mxu0 %v197
  %v347 = vpop.f32.mrb[0].mxu0
  %v348 = vadd.f32 %v74, %v347
  %v349 = vpop.f32.mrb[0].mxu0
  %v350 = vpop.f32.mrb[0].mxu0
  %v351 = vadd.f32 %v74, %v350
  %v352 = vpop.f32.mrb[0].mxu0
  %353 = vmatprep.mubr.bf16.mxu0 0
  %354 = vmatmul.mubr.bf16.gmra.mrb[0].mxu0 %v200
  %v355 = vpop.f32.mrb[0].mxu0
  %v356 = vadd.f32 %v74, %v355
  %v357 = vpop.f32.mrb[0].mxu0
  %v358 = vpop.f32.mrb[0].mxu0
  %v359 = vadd.f32 %v74, %v358
  %v360 = vpop.f32.mrb[0].mxu0
  %361 = vmatprep.mubr.bf16.mxu0 0
  %362 = vmatmul.mubr.bf16.gmra.mrb[0].mxu0 %v203
  %v363 = vpop.f32.mrb[0].mxu0
  %v364 = vadd.f32 %v74, %v363
  %v365 = vpop.f32.mrb[0].mxu0
  %v366 = vpop.f32.mrb[0].mxu0
  %v367 = vadd.f32 %v74, %v366
  %v368 = vpop.f32.mrb[0].mxu0
  %369 = vdwg.mxu0
  %v370 = vld [vmem:[%s2] sm:$0xff]
  %v371 = vld [vmem:[%s2 + $0x8] sm:$0xff]
  %v372 = vld [vmem:[%s2 + $0x10] sm:$0xff]
  %v373 = vld [vmem:[%s2 + $0x18] sm:$0xff]
  %v374 = vld [vmem:[%s2 + $0x20] sm:$0xff]
  %v375 = vld [vmem:[%s2 + $0x28] sm:$0xff]
  %v376 = vld [vmem:[%s2 + $0x30] sm:$0xff]
  %v377 = vld [vmem:[%s2 + $0x38] sm:$0xff]
  %v378 = vld [vmem:[%s2 + $0x40] sm:$0xff]
  %v379 = vld [vmem:[%s2 + $0x48] sm:$0xff]
  %v380 = vld [vmem:[%s2 + $0x50] sm:$0xff]
  %v381 = vld [vmem:[%s2 + $0x58] sm:$0xff]
  %v382 = vld [vmem:[%s2 + $0x60] sm:$0xff]
  %v383 = vld [vmem:[%s2 + $0x68] sm:$0xff]
  %v384 = vld [vmem:[%s2 + $0x70] sm:$0xff]
  %v385 = vld [vmem:[%s2 + $0x78] sm:$0xff]
  %v386 = vld [vmem:[%s2 + $0x80] sm:$0xff]
  %v387 = vld [vmem:[%s2 + $0x88] sm:$0xff]
  %v388 = vld [vmem:[%s2 + $0x90] sm:$0xff]
  %v389 = vld [vmem:[%s2 + $0x98] sm:$0xff]
  %v390 = vld [vmem:[%s2 + $0xa0] sm:$0xff]
  %v391 = vld [vmem:[%s2 + $0xa8] sm:$0xff]
  %v392 = vld [vmem:[%s2 + $0xb0] sm:$0xff]
  %v393 = vld [vmem:[%s2 + $0xb8] sm:$0xff]
  %v394 = vunpack.c.l.s8.bf16 %v370
  %v395 = vunpack.c.l.s8.bf16 %v371
  %v396 = vunpack.c.l.s8.bf16 %v372
  %v397 = vunpack.c.h.s8.bf16 %v370
  %v398 = vunpack.c.h.s8.bf16 %v371
  %v399 = vunpack.c.h.s8.bf16 %v372
  %v400 = vunpack.c.l.s8.bf16 %v373
  %v401 = vunpack.c.l.s8.bf16 %v374
  %v402 = vunpack.c.l.s8.bf16 %v375
  %v403 = vunpack.c.h.s8.bf16 %v373
  %v404 = vunpack.c.h.s8.bf16 %v374
  %v405 = vunpack.c.h.s8.bf16 %v375
  %v406 = vunpack.c.l.s8.bf16 %v376
  %v407 = vunpack.c.l.s8.bf16 %v377
  %v408 = vunpack.c.l.s8.bf16 %v378
  %v409 = vunpack.c.h.s8.bf16 %v376
  %v410 = vunpack.c.h.s8.bf16 %v377
  %v411 = vunpack.c.h.s8.bf16 %v378
  %v412 = vunpack.c.l.s8.bf16 %v379
  %v413 = vunpack.c.l.s8.bf16 %v380
  %v414 = vunpack.c.l.s8.bf16 %v381
  %v415 = vunpack.c.h.s8.bf16 %v379
  %v416 = vunpack.c.h.s8.bf16 %v380
  %v417 = vunpack.c.h.s8.bf16 %v381
  %v418 = vunpack.c.l.s8.bf16 %v382
  %v419 = vunpack.c.l.s8.bf16 %v383
  %v420 = vunpack.c.l.s8.bf16 %v384
  %v421 = vunpack.c.h.s8.bf16 %v382
  %v422 = vunpack.c.h.s8.bf16 %v383
  %v423 = vunpack.c.h.s8.bf16 %v384
  %v424 = vunpack.c.l.s8.bf16 %v385
  %v425 = vunpack.c.l.s8.bf16 %v386
  %v426 = vunpack.c.l.s8.bf16 %v387
  %v427 = vunpack.c.h.s8.bf16 %v385
  %v428 = vunpack.c.h.s8.bf16 %v386
  %v429 = vunpack.c.h.s8.bf16 %v387
  %v430 = vunpack.c.l.s8.bf16 %v388
  %v431 = vunpack.c.l.s8.bf16 %v389
  %v432 = vunpack.c.l.s8.bf16 %v390
  %v433 = vunpack.c.h.s8.bf16 %v388
  %v434 = vunpack.c.h.s8.bf16 %v389
  %v435 = vunpack.c.h.s8.bf16 %v390
  %v436 = vunpack.c.l.s8.bf16 %v391
  %v437 = vunpack.c.l.s8.bf16 %v392
  %v438 = vunpack.c.l.s8.bf16 %v393
  %v439 = vunpack.c.h.s8.bf16 %v391
  %v440 = vunpack.c.h.s8.bf16 %v392
  %v441 = vunpack.c.h.s8.bf16 %v393
  %v442 = vld [vmem:[%s1] sm:$0xf]
  %v443 = vld [vmem:[%s1 + $0x4] sm:$0xf]
  %v444 = vld [vmem:[%s1 + $0x8] sm:$0xf]
  %v445 = vld [vmem:[%s1 + $0xc] sm:$0xf]
  %v446 = vld [vmem:[%s1 + $0x10] sm:$0xf]
  %v447 = vld [vmem:[%s1 + $0x14] sm:$0xf]
  %v448 = vld [vmem:[%s1 + $0x18] sm:$0xf]
  %v449 = vld [vmem:[%s1 + $0x1c] sm:$0xf]
  %v450 = vld [vmem:[%s1 + $0x20] sm:$0xf]
  %v451 = vld [vmem:[%s1 + $0x24] sm:$0xf]
  %v452 = vld [vmem:[%s1 + $0x28] sm:$0xf]
  %v453 = vld [vmem:[%s1 + $0x2c] sm:$0xf]
  %v454 = vld [vmem:[%s1 + $0x30] sm:$0xf]
  %v455 = vld [vmem:[%s1 + $0x34] sm:$0xf]
  %v456 = vld [vmem:[%s1 + $0x38] sm:$0xf]
  %v457 = vld [vmem:[%s1 + $0x3c] sm:$0xf]
  %v458 = vld [vmem:[%s1 + $0x40] sm:$0xf]
  %v459 = vld [vmem:[%s1 + $0x44] sm:$0xf]
  %v460 = vld [vmem:[%s1 + $0x48] sm:$0xf]
  %v461 = vld [vmem:[%s1 + $0x4c] sm:$0xf]
  %v462 = vld [vmem:[%s1 + $0x50] sm:$0xf]
  %v463 = vld [vmem:[%s1 + $0x54] sm:$0xf]
  %v464 = vld [vmem:[%s1 + $0x58] sm:$0xf]
  %v465 = vld [vmem:[%s1 + $0x5c] sm:$0xf]
  %v466 = vld [vmem:[%s1 + $0x60] sm:$0xf]
  %v467 = vld [vmem:[%s1 + $0x64] sm:$0xf]
  %v468 = vld [vmem:[%s1 + $0x68] sm:$0xf]
  %v469 = vld [vmem:[%s1 + $0x6c] sm:$0xf]
  %v470 = vld [vmem:[%s1 + $0x70] sm:$0xf]
  %v471 = vld [vmem:[%s1 + $0x74] sm:$0xf]
  %v472 = vld [vmem:[%s1 + $0x78] sm:$0xf]
  %v473 = vld [vmem:[%s1 + $0x7c] sm:$0xf]
  %v474 = vld [vmem:[%s1 + $0x80] sm:$0xf]
  %v475 = vld [vmem:[%s1 + $0x84] sm:$0xf]
  %v476 = vld [vmem:[%s1 + $0x88] sm:$0xf]
  %v477 = vld [vmem:[%s1 + $0x8c] sm:$0xf]
  %v478 = vld [vmem:[%s1 + $0x90] sm:$0xf]
  %v479 = vld [vmem:[%s1 + $0x94] sm:$0xf]
  %v480 = vld [vmem:[%s1 + $0x98] sm:$0xf]
  %v481 = vld [vmem:[%s1 + $0x9c] sm:$0xf]
  %v482 = vld [vmem:[%s1 + $0xa0] sm:$0xf]
  %v483 = vld [vmem:[%s1 + $0xa4] sm:$0xf]
  %v484 = vld [vmem:[%s1 + $0xa8] sm:$0xf]
  %v485 = vld [vmem:[%s1 + $0xac] sm:$0xf]
  %v486 = vld [vmem:[%s1 + $0xb0] sm:$0xf]
  %v487 = vld [vmem:[%s1 + $0xb4] sm:$0xf]
  %v488 = vld [vmem:[%s1 + $0xb8] sm:$0xf]
  %v489 = vld [vmem:[%s1 + $0xbc] sm:$0xf]
  %v538 = vunpack.c.l.b16 %v442
  %v539 = vunpack.c.l.b16 %v443
  %v540 = vunpack.c.l.b16 %v444
  %v541 = vunpack.c.l.b16 %v445
  %v542 = vunpack.c.l.b16 %v446
  %v543 = vunpack.c.l.b16 %v447
  %v544 = vunpack.c.l.b16 %v448
  %v545 = vunpack.c.l.b16 %v449
  %v546 = vunpack.c.l.b16 %v450
  %v547 = vunpack.c.l.b16 %v451
  %v548 = vunpack.c.l.b16 %v452
  %v549 = vunpack.c.l.b16 %v453
  %v550 = vunpack.c.l.b16 %v454
  %v551 = vunpack.c.l.b16 %v455
  %v552 = vunpack.c.l.b16 %v456
  %v553 = vunpack.c.l.b16 %v457
  %v554 = vunpack.c.l.b16 %v458
  %v555 = vunpack.c.l.b16 %v459
  %v556 = vunpack.c.l.b16 %v460
  %v557 = vunpack.c.l.b16 %v461
  %v558 = vunpack.c.l.b16 %v462
  %v559 = vunpack.c.l.b16 %v463
  %v560 = vunpack.c.l.b16 %v464
  %v561 = vunpack.c.l.b16 %v465
  %v562 = vunpack.c.l.b16 %v466
  %v563 = vunpack.c.l.b16 %v467
  %v564 = vunpack.c.l.b16 %v468
  %v565 = vunpack.c.l.b16 %v469
  %v566 = vunpack.c.l.b16 %v470
  %v567 = vunpack.c.l.b16 %v471
  %v568 = vunpack.c.l.b16 %v472
  %v569 = vunpack.c.l.b16 %v473
  %v570 = vunpack.c.l.b16 %v474
  %v571 = vunpack.c.l.b16 %v475
  %v572 = vunpack.c.l.b16 %v476
  %v573 = vunpack.c.l.b16 %v477
  %v574 = vunpack.c.l.b16 %v478
  %v575 = vunpack.c.l.b16 %v479
  %v576 = vunpack.c.l.b16 %v480
  %v577 = vunpack.c.l.b16 %v481
  %v578 = vunpack.c.l.b16 %v482
  %v579 = vunpack.c.l.b16 %v483
  %v580 = vunpack.c.l.b16 %v484
  %v581 = vunpack.c.l.b16 %v485
  %v582 = vunpack.c.l.b16 %v486
  %v583 = vunpack.c.l.b16 %v487
  %v584 = vunpack.c.l.b16 %v488
  %v585 = vunpack.c.l.b16 %v489
  %v586 = vpack.c.b16 %v539, %v538
  %v587 = vpack.c.b16 %v541, %v540
  %v588 = vpack.c.b16 %v543, %v542
  %v589 = vpack.c.b16 %v545, %v544
  %v590 = vpack.c.b16 %v547, %v546
  %v591 = vpack.c.b16 %v549, %v548
  %v592 = vpack.c.b16 %v551, %v550
  %v593 = vpack.c.b16 %v553, %v552
  %v594 = vpack.c.b16 %v555, %v554
  %v595 = vpack.c.b16 %v557, %v556
  %v596 = vpack.c.b16 %v559, %v558
  %v597 = vpack.c.b16 %v561, %v560
  %v598 = vpack.c.b16 %v563, %v562
  %v599 = vpack.c.b16 %v565, %v564
  %v600 = vpack.c.b16 %v567, %v566
  %v601 = vpack.c.b16 %v569, %v568
  %v602 = vpack.c.b16 %v571, %v570
  %v603 = vpack.c.b16 %v573, %v572
  %v604 = vpack.c.b16 %v575, %v574
  %v605 = vpack.c.b16 %v577, %v576
  %v606 = vpack.c.b16 %v579, %v578
  %v607 = vpack.c.b16 %v581, %v580
  %v608 = vpack.c.b16 %v583, %v582
  %v609 = vpack.c.b16 %v585, %v584
  %634 = vmatprep.subr.bf16.mxu0 0
  %635 = vmatpush1.bf16.msra.mxu0 %v586
  %636 = vmatprep.subr.bf16.mxu0 0
  %637 = vmatpush1.bf16.msra.mxu0 %v587
  %638 = vmatprep.subr.bf16.mxu0 0
  %639 = vmatpush1.bf16.msra.mxu0 %v588
  %640 = vmatprep.subr.bf16.mxu0 0
  %641 = vmatpush1.bf16.msra.mxu0 %v589
  %642 = vmatprep.subr.bf16.mxu0 0
  %643 = vmatpush1.bf16.msra.mxu0 %v590
  %644 = vmatprep.subr.bf16.mxu0 0
  %645 = vmatpush1.bf16.msra.mxu0 %v591
  %646 = vmatprep.subr.bf16.mxu0 0
  %647 = vmatpush1.bf16.msra.mxu0 %v592
  %648 = vmatprep.subr.bf16.mxu0 0
  %649 = vmatpush1.bf16.msra.mxu0 %v593
  %650 = vmatprep.subr.bf16.mxu0 0
  %651 = vmatpush1.bf16.msra.mxu0 %v594
  %652 = vmatprep.subr.bf16.mxu0 0
  %653 = vmatpush1.bf16.msra.mxu0 %v595
  %654 = vmatprep.subr.bf16.mxu0 0
  %655 = vmatpush1.bf16.msra.mxu0 %v596
  %656 = vmatprep.subr.bf16.mxu0 0
  %657 = vmatpush1.bf16.msra.mxu0 %v597
  %658 = vmatprep.subr.bf16.mxu0 0
  %659 = vmatpush1.bf16.msra.mxu0 %v598
  %660 = vmatprep.subr.bf16.mxu0 0
  %661 = vmatpush1.bf16.msra.mxu0 %v599
  %662 = vmatprep.subr.bf16.mxu0 0
  %663 = vmatpush1.bf16.msra.mxu0 %v600
  %664 = vmatprep.subr.bf16.mxu0 0
  %665 = vmatpush1.bf16.msra.mxu0 %v601
  %666 = vmatprep.mubr.bf16.mxu0 %v395
  %667 = vmatmul.mubr.bf16.gmra.mrb[0].mxu0 %v394
  %v668 = vpop.f32.mrb[0].mxu0
  %v669 = vadd.f32 0.0, %v668
  %v670 = vpop.f32.mrb[0].mxu0
  %v671 = vpop.f32.mrb[0].mxu0
  %v672 = vadd.f32 0.0, %v671
  %v673 = vpop.f32.mrb[0].mxu0
  %674 = vmatprep.mubr.bf16.mxu0 %v398
  %675 = vmatmul.mubr.bf16.gmra.mrb[0].mxu0 %v397
  %v676 = vpop.f32.mrb[0].mxu0
  %v677 = vadd.f32 0.0, %v676
  %v678 = vpop.f32.mrb[0].mxu0
  %v679 = vpop.f32.mrb[0].mxu0
  %v680 = vadd.f32 0.0, %v679
  %v681 = vpop.f32.mrb[0].mxu0
  %682 = vmatprep.mubr.bf16.mxu0 %v401
  %683 = vmatmul.mubr.bf16.gmra.mrb[0].mxu0 %v400
  %v684 = vpop.f32.mrb[0].mxu0
  %v685 = vadd.f32 0.0, %v684
  %v686 = vpop.f32.mrb[0].mxu0
  %v687 = vpop.f32.mrb[0].mxu0
  %v688 = vadd.f32 0.0, %v687
  %v689 = vpop.f32.mrb[0].mxu0
  %690 = vmatprep.mubr.bf16.mxu0 %v404
  %691 = vmatmul.mubr.bf16.gmra.mrb[0].mxu0 %v403
  %v692 = vpop.f32.mrb[0].mxu0
  %v693 = vadd.f32 0.0, %v692
  %v694 = vpop.f32.mrb[0].mxu0
  %v695 = vpop.f32.mrb[0].mxu0
  %v696 = vadd.f32 0.0, %v695
  %v697 = vpop.f32.mrb[0].mxu0
  %698 = vmatprep.mubr.bf16.mxu0 %v407
  %699 = vmatmul.mubr.bf16.gmra.mrb[0].mxu0 %v406
  %v700 = vpop.f32.mrb[0].mxu0
  %v701 = vadd.f32 0.0, %v700
  %v702 = vpop.f32.mrb[0].mxu0
  %v703 = vpop.f32.mrb[0].mxu0
  %v704 = vadd.f32 0.0, %v703
  %v705 = vpop.f32.mrb[0].mxu0
  %706 = vmatprep.mubr.bf16.mxu0 %v410
  %707 = vmatmul.mubr.bf16.gmra.mrb[0].mxu0 %v409
  %v708 = vpop.f32.mrb[0].mxu0
  %v709 = vadd.f32 0.0, %v708
  %v710 = vpop.f32.mrb[0].mxu0
  %v711 = vpop.f32.mrb[0].mxu0
  %v712 = vadd.f32 0.0, %v711
  %v713 = vpop.f32.mrb[0].mxu0
  %714 = vmatprep.mubr.bf16.mxu0 %v413
  %715 = vmatmul.mubr.bf16.gmra.mrb[0].mxu0 %v412
  %v716 = vpop.f32.mrb[0].mxu0
  %v717 = vadd.f32 0.0, %v716
  %v718 = vpop.f32.mrb[0].mxu0
  %v719 = vpop.f32.mrb[0].mxu0
  %v720 = vadd.f32 0.0, %v719
  %v721 = vpop.f32.mrb[0].mxu0
  %722 = vmatprep.mubr.bf16.mxu0 %v416
  %723 = vmatmul.mubr.bf16.gmra.mrb[0].mxu0 %v415
  %v724 = vpop.f32.mrb[0].mxu0
  %v725 = vadd.f32 0.0, %v724
  %v726 = vpop.f32.mrb[0].mxu0
  %v727 = vpop.f32.mrb[0].mxu0
  %v728 = vadd.f32 0.0, %v727
  %v729 = vpop.f32.mrb[0].mxu0
  %730 = vmatprep.mubr.bf16.mxu0 %v419
  %731 = vmatmul.mubr.bf16.gmra.mrb[0].mxu0 %v418
  %v732 = vpop.f32.mrb[0].mxu0
  %v733 = vadd.f32 0.0, %v732
  %v734 = vpop.f32.mrb[0].mxu0
  %v735 = vpop.f32.mrb[0].mxu0
  %v736 = vadd.f32 0.0, %v735
  %v737 = vpop.f32.mrb[0].mxu0
  %738 = vmatprep.mubr.bf16.mxu0 %v422
  %739 = vmatmul.mubr.bf16.gmra.mrb[0].mxu0 %v421
  %v740 = vpop.f32.mrb[0].mxu0
  %v741 = vadd.f32 0.0, %v740
  %v742 = vpop.f32.mrb[0].mxu0
  %v743 = vpop.f32.mrb[0].mxu0
  %v744 = vadd.f32 0.0, %v743
  %v745 = vpop.f32.mrb[0].mxu0
  %746 = vmatprep.mubr.bf16.mxu0 %v425
  %747 = vmatmul.mubr.bf16.gmra.mrb[0].mxu0 %v424
  %v748 = vpop.f32.mrb[0].mxu0
  %v749 = vadd.f32 0.0, %v748
  %v750 = vpop.f32.mrb[0].mxu0
  %v751 = vpop.f32.mrb[0].mxu0
  %v752 = vadd.f32 0.0, %v751
  %v753 = vpop.f32.mrb[0].mxu0
  %754 = vmatprep.mubr.bf16.mxu0 %v428
  %755 = vmatmul.mubr.bf16.gmra.mrb[0].mxu0 %v427
  %v756 = vpop.f32.mrb[0].mxu0
  %v757 = vadd.f32 0.0, %v756
  %v758 = vpop.f32.mrb[0].mxu0
  %v759 = vpop.f32.mrb[0].mxu0
  %v760 = vadd.f32 0.0, %v759
  %v761 = vpop.f32.mrb[0].mxu0
  %762 = vmatprep.mubr.bf16.mxu0 %v431
  %763 = vmatmul.mubr.bf16.gmra.mrb[0].mxu0 %v430
  %v764 = vpop.f32.mrb[0].mxu0
  %v765 = vadd.f32 0.0, %v764
  %v766 = vpop.f32.mrb[0].mxu0
  %v767 = vpop.f32.mrb[0].mxu0
  %v768 = vadd.f32 0.0, %v767
  %v769 = vpop.f32.mrb[0].mxu0
  %770 = vmatprep.mubr.bf16.mxu0 %v434
  %771 = vmatmul.mubr.bf16.gmra.mrb[0].mxu0 %v433
  %v772 = vpop.f32.mrb[0].mxu0
  %v773 = vadd.f32 0.0, %v772
  %v774 = vpop.f32.mrb[0].mxu0
  %v775 = vpop.f32.mrb[0].mxu0
  %v776 = vadd.f32 0.0, %v775
  %v777 = vpop.f32.mrb[0].mxu0
  %778 = vmatprep.mubr.bf16.mxu0 %v437
  %779 = vmatmul.mubr.bf16.gmra.mrb[0].mxu0 %v436
  %v780 = vpop.f32.mrb[0].mxu0
  %v781 = vadd.f32 0.0, %v780
  %v782 = vpop.f32.mrb[0].mxu0
  %v783 = vpop.f32.mrb[0].mxu0
  %v784 = vadd.f32 0.0, %v783
  %v785 = vpop.f32.mrb[0].mxu0
  %786 = vmatprep.mubr.bf16.mxu0 %v440
  %787 = vmatmul.mubr.bf16.gmra.mrb[0].mxu0 %v439
  %v788 = vpop.f32.mrb[0].mxu0
  %v789 = vadd.f32 0.0, %v788
  %v790 = vpop.f32.mrb[0].mxu0
  %v791 = vpop.f32.mrb[0].mxu0
  %v792 = vadd.f32 0.0, %v791
  %v793 = vpop.f32.mrb[0].mxu0
  %794 = vdwg.mxu0
  %795 = vmatprep.subr.bf16.mxu0 0
  %796 = vmatpush1.bf16.msra.mxu0 %v602
  %797 = vmatprep.subr.bf16.mxu0 0
  %798 = vmatpush1.bf16.msra.mxu0 %v603
  %799 = vmatprep.subr.bf16.mxu0 0
  %800 = vmatpush1.bf16.msra.mxu0 %v604
  %801 = vmatprep.subr.bf16.mxu0 0
  %802 = vmatpush1.bf16.msra.mxu0 %v605
  %803 = vmatprep.subr.bf16.mxu0 0
  %804 = vmatpush1.bf16.msra.mxu0 %v606
  %805 = vmatprep.subr.bf16.mxu0 0
  %806 = vmatpush1.bf16.msra.mxu0 %v607
  %807 = vmatprep.subr.bf16.mxu0 0
  %808 = vmatpush1.bf16.msra.mxu0 %v608
  %809 = vmatprep.subr.bf16.mxu0 0
  %810 = vmatpush1.bf16.msra.mxu0 %v609
  %811 = vmatprep.subr.bf16.mxu0 0
  %812 = vmatpush1.bf16.msra.mxu0 0
  %813 = vmatprep.subr.bf16.mxu0 0
  %814 = vmatpush1.bf16.msra.mxu0 0
  %815 = vmatprep.subr.bf16.mxu0 0
  %816 = vmatpush1.bf16.msra.mxu0 0
  %817 = vmatprep.subr.bf16.mxu0 0
  %818 = vmatpush1.bf16.msra.mxu0 0
  %819 = vmatprep.subr.bf16.mxu0 0
  %820 = vmatpush1.bf16.msra.mxu0 0
  %821 = vmatprep.subr.bf16.mxu0 0
  %822 = vmatpush1.bf16.msra.mxu0 0
  %823 = vmatprep.subr.bf16.mxu0 0
  %824 = vmatpush1.bf16.msra.mxu0 0
  %825 = vmatprep.subr.bf16.mxu0 0
  %826 = vmatpush1.bf16.msra.mxu0 0
  %827 = vmatprep.mubr.bf16.mxu0 0
  %828 = vmatmul.mubr.bf16.gmra.mrb[0].mxu0 %v396
  %v829 = vpop.f32.mrb[0].mxu0
  %v830 = vadd.f32 %v669, %v829
  %v831 = vpop.f32.mrb[0].mxu0
  %v832 = vpop.f32.mrb[0].mxu0
  %v833 = vadd.f32 %v672, %v832
  %v834 = vpop.f32.mrb[0].mxu0
  %835 = vmatprep.mubr.bf16.mxu0 0
  %836 = vmatmul.mubr.bf16.gmra.mrb[0].mxu0 %v399
  %v837 = vpop.f32.mrb[0].mxu0
  %v838 = vadd.f32 %v677, %v837
  %v839 = vpop.f32.mrb[0].mxu0
  %v840 = vpop.f32.mrb[0].mxu0
  %v841 = vadd.f32 %v680, %v840
  %v842 = vpop.f32.mrb[0].mxu0
  %843 = vmatprep.mubr.bf16.mxu0 0
  %844 = vmatmul.mubr.bf16.gmra.mrb[0].mxu0 %v402
  %v845 = vpop.f32.mrb[0].mxu0
  %v846 = vadd.f32 %v685, %v845
  %v847 = vpop.f32.mrb[0].mxu0
  %v848 = vpop.f32.mrb[0].mxu0
  %v849 = vadd.f32 %v688, %v848
  %v850 = vpop.f32.mrb[0].mxu0
  %851 = vmatprep.mubr.bf16.mxu0 0
  %852 = vmatmul.mubr.bf16.gmra.mrb[0].mxu0 %v405
  %v853 = vpop.f32.mrb[0].mxu0
  %v854 = vadd.f32 %v693, %v853
  %v855 = vpop.f32.mrb[0].mxu0
  %v856 = vpop.f32.mrb[0].mxu0
  %v857 = vadd.f32 %v696, %v856
  %v858 = vpop.f32.mrb[0].mxu0
  %859 = vmatprep.mubr.bf16.mxu0 0
  %860 = vmatmul.mubr.bf16.gmra.mrb[0].mxu0 %v408
  %v861 = vpop.f32.mrb[0].mxu0
  %v862 = vadd.f32 %v701, %v861
  %v863 = vpop.f32.mrb[0].mxu0
  %v864 = vpop.f32.mrb[0].mxu0
  %v865 = vadd.f32 %v704, %v864
  %v866 = vpop.f32.mrb[0].mxu0
  %867 = vmatprep.mubr.bf16.mxu0 0
  %868 = vmatmul.mubr.bf16.gmra.mrb[0].mxu0 %v411
  %v869 = vpop.f32.mrb[0].mxu0
  %v870 = vadd.f32 %v709, %v869
  %v871 = vpop.f32.mrb[0].mxu0
  %v872 = vpop.f32.mrb[0].mxu0
  %v873 = vadd.f32 %v712, %v872
  %v874 = vpop.f32.mrb[0].mxu0
  %875 = vmatprep.mubr.bf16.mxu0 0
  %876 = vmatmul.mubr.bf16.gmra.mrb[0].mxu0 %v414
  %v877 = vpop.f32.mrb[0].mxu0
  %v878 = vadd.f32 %v717, %v877
  %v879 = vpop.f32.mrb[0].mxu0
  %v880 = vpop.f32.mrb[0].mxu0
  %v881 = vadd.f32 %v720, %v880
  %v882 = vpop.f32.mrb[0].mxu0
  %883 = vmatprep.mubr.bf16.mxu0 0
  %884 = vmatmul.mubr.bf16.gmra.mrb[0].mxu0 %v417
  %v885 = vpop.f32.mrb[0].mxu0
  %v886 = vadd.f32 %v725, %v885
  %v887 = vpop.f32.mrb[0].mxu0
  %v888 = vpop.f32.mrb[0].mxu0
  %v889 = vadd.f32 %v728, %v888
  %v890 = vpop.f32.mrb[0].mxu0
  %891 = vmatprep.mubr.bf16.mxu0 0
  %892 = vmatmul.mubr.bf16.gmra.mrb[0].mxu0 %v420
  %v893 = vpop.f32.mrb[0].mxu0
  %v894 = vadd.f32 %v733, %v893
  %v895 = vpop.f32.mrb[0].mxu0
  %v896 = vpop.f32.mrb[0].mxu0
  %v897 = vadd.f32 %v736, %v896
  %v898 = vpop.f32.mrb[0].mxu0
  %899 = vmatprep.mubr.bf16.mxu0 0
  %900 = vmatmul.mubr.bf16.gmra.mrb[0].mxu0 %v423
  %v901 = vpop.f32.mrb[0].mxu0
  %v902 = vadd.f32 %v741, %v901
  %v903 = vpop.f32.mrb[0].mxu0
  %v904 = vpop.f32.mrb[0].mxu0
  %v905 = vadd.f32 %v744, %v904
  %v906 = vpop.f32.mrb[0].mxu0
  %907 = vmatprep.mubr.bf16.mxu0 0
  %908 = vmatmul.mubr.bf16.gmra.mrb[0].mxu0 %v426
  %v909 = vpop.f32.mrb[0].mxu0
  %v910 = vadd.f32 %v749, %v909
  %v911 = vpop.f32.mrb[0].mxu0
  %v912 = vpop.f32.mrb[0].mxu0
  %v913 = vadd.f32 %v752, %v912
  %v914 = vpop.f32.mrb[0].mxu0
  %915 = vmatprep.mubr.bf16.mxu0 0
  %916 = vmatmul.mubr.bf16.gmra.mrb[0].mxu0 %v429
  %v917 = vpop.f32.mrb[0].mxu0
  %v918 = vadd.f32 %v757, %v917
  %v919 = vpop.f32.mrb[0].mxu0
  %v920 = vpop.f32.mrb[0].mxu0
  %v921 = vadd.f32 %v760, %v920
  %v922 = vpop.f32.mrb[0].mxu0
  %923 = vmatprep.mubr.bf16.mxu0 0
  %924 = vmatmul.mubr.bf16.gmra.mrb[0].mxu0 %v432
  %v925 = vpop.f32.mrb[0].mxu0
  %v926 = vadd.f32 %v765, %v925
  %v927 = vpop.f32.mrb[0].mxu0
  %v928 = vpop.f32.mrb[0].mxu0
  %v929 = vadd.f32 %v768, %v928
  %v930 = vpop.f32.mrb[0].mxu0
  %931 = vmatprep.mubr.bf16.mxu0 0
  %932 = vmatmul.mubr.bf16.gmra.mrb[0].mxu0 %v435
  %v933 = vpop.f32.mrb[0].mxu0
  %v934 = vadd.f32 %v773, %v933
  %v935 = vpop.f32.mrb[0].mxu0
  %v936 = vpop.f32.mrb[0].mxu0
  %v937 = vadd.f32 %v776, %v936
  %v938 = vpop.f32.mrb[0].mxu0
  %939 = vmatprep.mubr.bf16.mxu0 0
  %940 = vmatmul.mubr.bf16.gmra.mrb[0].mxu0 %v438
  %v941 = vpop.f32.mrb[0].mxu0
  %v942 = vadd.f32 %v781, %v941
  %v943 = vpop.f32.mrb[0].mxu0
  %v944 = vpop.f32.mrb[0].mxu0
  %v945 = vadd.f32 %v784, %v944
  %v946 = vpop.f32.mrb[0].mxu0
  %947 = vmatprep.mubr.bf16.mxu0 0
  %948 = vmatmul.mubr.bf16.gmra.mrb[0].mxu0 %v441
  %v949 = vpop.f32.mrb[0].mxu0
  %v950 = vadd.f32 %v789, %v949
  %v951 = vpop.f32.mrb[0].mxu0
  %v952 = vpop.f32.mrb[0].mxu0
  %v953 = vadd.f32 %v792, %v952
  %v954 = vpop.f32.mrb[0].mxu0
  %955 = vdwg.mxu0
  %v956 = vadd.f32 %v244, %v830
  %v957 = vadd.f32 %v247, %v833
  %v958 = vadd.f32 %v252, %v838
  %v959 = vadd.f32 %v255, %v841
  %v960 = vadd.f32 %v260, %v846
  %v961 = vadd.f32 %v263, %v849
  %v962 = vadd.f32 %v268, %v854
  %v963 = vadd.f32 %v271, %v857
  %v964 = vadd.f32 %v276, %v862
  %v965 = vadd.f32 %v279, %v865
  %v966 = vadd.f32 %v284, %v870
  %v967 = vadd.f32 %v287, %v873
  %v968 = vadd.f32 %v292, %v878
  %v969 = vadd.f32 %v295, %v881
  %v970 = vadd.f32 %v300, %v886
  %v971 = vadd.f32 %v303, %v889
  %v972 = vadd.f32 %v308, %v894
  %v973 = vadd.f32 %v311, %v897
  %v974 = vadd.f32 %v316, %v902
  %v975 = vadd.f32 %v319, %v905
  %v976 = vadd.f32 %v324, %v910
  %v977 = vadd.f32 %v327, %v913
  %v978 = vadd.f32 %v332, %v918
  %v979 = vadd.f32 %v335, %v921
  %v980 = vadd.f32 %v340, %v926
  %v981 = vadd.f32 %v343, %v929
  %v982 = vadd.f32 %v348, %v934
  %v983 = vadd.f32 %v351, %v937
  %v984 = vadd.f32 %v356, %v942
  %v985 = vadd.f32 %v359, %v945
  %v986 = vadd.f32 %v364, %v950
  %v987 = vadd.f32 %v367, %v953
  %v988 = vmax.f32 %v956, 0.0
  %v989 = vmax.f32 %v957, 0.0
  %v990 = vmax.f32 %v958, 0.0
  %v991 = vmax.f32 %v959, 0.0
  %v992 = vmax.f32 %v960, 0.0
  %v993 = vmax.f32 %v961, 0.0
  %v994 = vmax.f32 %v962, 0.0
  %v995 = vmax.f32 %v963, 0.0
  %v996 = vmax.f32 %v964, 0.0
  %v997 = vmax.f32 %v965, 0.0
  %v998 = vmax.f32 %v966, 0.0
  %v999 = vmax.f32 %v967, 0.0
  %v1000 = vmax.f32 %v968, 0.0
  %v1001 = vmax.f32 %v969, 0.0
  %v1002 = vmax.f32 %v970, 0.0
  %v1003 = vmax.f32 %v971, 0.0
  %v1004 = vmax.f32 %v972, 0.0
  %v1005 = vmax.f32 %v973, 0.0
  %v1006 = vmax.f32 %v974, 0.0
  %v1007 = vmax.f32 %v975, 0.0
  %v1008 = vmax.f32 %v976, 0.0
  %v1009 = vmax.f32 %v977, 0.0
  %v1010 = vmax.f32 %v978, 0.0
  %v1011 = vmax.f32 %v979, 0.0
  %v1012 = vmax.f32 %v980, 0.0
  %v1013 = vmax.f32 %v981, 0.0
  %v1014 = vmax.f32 %v982, 0.0
  %v1015 = vmax.f32 %v983, 0.0
  %v1016 = vmax.f32 %v984, 0.0
  %v1017 = vmax.f32 %v985, 0.0
  %v1018 = vmax.f32 %v986, 0.0
  %v1019 = vmax.f32 %v987, 0.0
  %v1020 = vpack.c.bf16 %v989, %v988
  %v1021 = vpack.c.bf16 %v991, %v990
  %v1022 = vpack.c.bf16 %v993, %v992
  %v1023 = vpack.c.bf16 %v995, %v994
  %v1024 = vpack.c.bf16 %v997, %v996
  %v1025 = vpack.c.bf16 %v999, %v998
  %v1026 = vpack.c.bf16 %v1001, %v1000
  %v1027 = vpack.c.bf16 %v1003, %v1002
  %v1028 = vpack.c.bf16 %v1005, %v1004
  %v1029 = vpack.c.bf16 %v1007, %v1006
  %v1030 = vpack.c.bf16 %v1009, %v1008
  %v1031 = vpack.c.bf16 %v1011, %v1010
  %v1032 = vpack.c.bf16 %v1013, %v1012
  %v1033 = vpack.c.bf16 %v1015, %v1014
  %v1034 = vpack.c.bf16 %v1017, %v1016
  %v1035 = vpack.c.bf16 %v1019, %v1018
  %v1036 = vld [vmem:[%s3] sm:$0xff]
  %v1037 = vld [vmem:[%s3 + $0x8] sm:$0xff]
  %v1038 = vld [vmem:[%s3 + $0x10] sm:$0xff]
  %v1039 = vld [vmem:[%s3 + $0x18] sm:$0xff]
  %v1040 = vld [vmem:[%s3 + $0x20] sm:$0xff]
  %v1041 = vld [vmem:[%s3 + $0x28] sm:$0xff]
  %v1042 = vld [vmem:[%s3 + $0x30] sm:$0xff]
  %v1043 = vld [vmem:[%s3 + $0x38] sm:$0xff]
  %v1044 = vld [vmem:[%s3 + $0x40] sm:$0xff]
  %v1045 = vld [vmem:[%s3 + $0x48] sm:$0xff]
  %v1046 = vld [vmem:[%s3 + $0x50] sm:$0xff]
  %v1047 = vld [vmem:[%s3 + $0x58] sm:$0xff]
  %v1048 = vld [vmem:[%s3 + $0x60] sm:$0xff]
  %v1049 = vld [vmem:[%s3 + $0x68] sm:$0xff]
  %v1050 = vld [vmem:[%s3 + $0x70] sm:$0xff]
  %v1051 = vld [vmem:[%s3 + $0x78] sm:$0xff]
  %v1052 = vunpack.c.l.s8.bf16 %v1036
  %v1053 = vunpack.c.l.s8.bf16 %v1037
  %v1054 = vunpack.c.h.s8.bf16 %v1036
  %v1055 = vunpack.c.h.s8.bf16 %v1037
  %v1056 = vunpack.c.l.s8.bf16 %v1038
  %v1057 = vunpack.c.l.s8.bf16 %v1039
  %v1058 = vunpack.c.h.s8.bf16 %v1038
  %v1059 = vunpack.c.h.s8.bf16 %v1039
  %v1060 = vunpack.c.l.s8.bf16 %v1040
  %v1061 = vunpack.c.l.s8.bf16 %v1041
  %v1062 = vunpack.c.h.s8.bf16 %v1040
  %v1063 = vunpack.c.h.s8.bf16 %v1041
  %v1064 = vunpack.c.l.s8.bf16 %v1042
  %v1065 = vunpack.c.l.s8.bf16 %v1043
  %v1066 = vunpack.c.h.s8.bf16 %v1042
  %v1067 = vunpack.c.h.s8.bf16 %v1043
  %v1068 = vunpack.c.l.s8.bf16 %v1044
  %v1069 = vunpack.c.l.s8.bf16 %v1045
  %v1070 = vunpack.c.h.s8.bf16 %v1044
  %v1071 = vunpack.c.h.s8.bf16 %v1045
  %v1072 = vunpack.c.l.s8.bf16 %v1046
  %v1073 = vunpack.c.l.s8.bf16 %v1047
  %v1074 = vunpack.c.h.s8.bf16 %v1046
  %v1075 = vunpack.c.h.s8.bf16 %v1047
  %v1076 = vunpack.c.l.s8.bf16 %v1048
  %v1077 = vunpack.c.l.s8.bf16 %v1049
  %v1078 = vunpack.c.h.s8.bf16 %v1048
  %v1079 = vunpack.c.h.s8.bf16 %v1049
  %v1080 = vunpack.c.l.s8.bf16 %v1050
  %v1081 = vunpack.c.l.s8.bf16 %v1051
  %v1082 = vunpack.c.h.s8.bf16 %v1050
  %v1083 = vunpack.c.h.s8.bf16 %v1051
  %v1084 = vld [vmem:[%s6] sm:$0xf]
  %v1085 = vld [vmem:[%s6 + $0x4] sm:$0xf]
  %v1086 = vld [vmem:[%s6 + $0x8] sm:$0xf]
  %v1087 = vld [vmem:[%s6 + $0xc] sm:$0xf]
  %v1088 = vld [vmem:[%s6 + $0x10] sm:$0xf]
  %v1089 = vld [vmem:[%s6 + $0x14] sm:$0xf]
  %v1090 = vld [vmem:[%s6 + $0x18] sm:$0xf]
  %v1091 = vld [vmem:[%s6 + $0x1c] sm:$0xf]
  %v1092 = vld [vmem:[%s6 + $0x20] sm:$0xf]
  %v1093 = vld [vmem:[%s6 + $0x24] sm:$0xf]
  %v1094 = vld [vmem:[%s6 + $0x28] sm:$0xf]
  %v1095 = vld [vmem:[%s6 + $0x2c] sm:$0xf]
  %v1096 = vld [vmem:[%s6 + $0x30] sm:$0xf]
  %v1097 = vld [vmem:[%s6 + $0x34] sm:$0xf]
  %v1098 = vld [vmem:[%s6 + $0x38] sm:$0xf]
  %v1099 = vld [vmem:[%s6 + $0x3c] sm:$0xf]
  %v1100 = vld [vmem:[%s7] sm:$0x1]
  %1101 = vmatprep.subr.bf16.mxu0 0
  %1102 = vmatpush1.bf16.msra.mxu0 %v1020
  %1103 = vmatprep.subr.bf16.mxu0 0
  %1104 = vmatpush1.bf16.msra.mxu0 %v1021
  %1105 = vmatprep.subr.bf16.mxu0 0
  %1106 = vmatpush1.bf16.msra.mxu0 %v1022
  %1107 = vmatprep.subr.bf16.mxu0 0
  %1108 = vmatpush1.bf16.msra.mxu0 %v1023
  %1109 = vmatprep.subr.bf16.mxu0 0
  %1110 = vmatpush1.bf16.msra.mxu0 %v1024
  %1111 = vmatprep.subr.bf16.mxu0 0
  %1112 = vmatpush1.bf16.msra.mxu0 %v1025
  %1113 = vmatprep.subr.bf16.mxu0 0
  %1114 = vmatpush1.bf16.msra.mxu0 %v1026
  %1115 = vmatprep.subr.bf16.mxu0 0
  %1116 = vmatpush1.bf16.msra.mxu0 %v1027
  %1117 = vmatprep.subr.bf16.mxu0 0
  %1118 = vmatpush1.bf16.msra.mxu0 %v1028
  %1119 = vmatprep.subr.bf16.mxu0 0
  %1120 = vmatpush1.bf16.msra.mxu0 %v1029
  %1121 = vmatprep.subr.bf16.mxu0 0
  %1122 = vmatpush1.bf16.msra.mxu0 %v1030
  %1123 = vmatprep.subr.bf16.mxu0 0
  %1124 = vmatpush1.bf16.msra.mxu0 %v1031
  %1125 = vmatprep.subr.bf16.mxu0 0
  %1126 = vmatpush1.bf16.msra.mxu0 %v1032
  %1127 = vmatprep.subr.bf16.mxu0 0
  %1128 = vmatpush1.bf16.msra.mxu0 %v1033
  %1129 = vmatprep.subr.bf16.mxu0 0
  %1130 = vmatpush1.bf16.msra.mxu0 %v1034
  %1131 = vmatprep.subr.bf16.mxu0 0
  %1132 = vmatpush1.bf16.msra.mxu0 %v1035
  %1133 = vmatprep.mubr.bf16.mxu0 %v1053
  %1134 = vmatmul.mubr.bf16.gmra.mrb[0].mxu0 %v1052
  %v1135 = vpop.f32.mrb[0].mxu0
  %v1136 = vadd.f32 0.0, %v1135
  %v1137 = vpop.f32.mrb[0].mxu0
  %v1138 = vpop.f32.mrb[0].mxu0
  %v1139 = vadd.f32 0.0, %v1138
  %v1140 = vpop.f32.mrb[0].mxu0
  %1141 = vmatprep.mubr.bf16.mxu0 %v1055
  %1142 = vmatmul.mubr.bf16.gmra.mrb[0].mxu0 %v1054
  %v1143 = vpop.f32.mrb[0].mxu0
  %v1144 = vadd.f32 0.0, %v1143
  %v1145 = vpop.f32.mrb[0].mxu0
  %v1146 = vpop.f32.mrb[0].mxu0
  %v1147 = vadd.f32 0.0, %v1146
  %v1148 = vpop.f32.mrb[0].mxu0
  %1149 = vmatprep.mubr.bf16.mxu0 %v1057
  %1150 = vmatmul.mubr.bf16.gmra.mrb[0].mxu0 %v1056
  %v1151 = vpop.f32.mrb[0].mxu0
  %v1152 = vadd.f32 0.0, %v1151
  %v1153 = vpop.f32.mrb[0].mxu0
  %v1154 = vpop.f32.mrb[0].mxu0
  %v1155 = vadd.f32 0.0, %v1154
  %v1156 = vpop.f32.mrb[0].mxu0
  %1157 = vmatprep.mubr.bf16.mxu0 %v1059
  %1158 = vmatmul.mubr.bf16.gmra.mrb[0].mxu0 %v1058
  %v1159 = vpop.f32.mrb[0].mxu0
  %v1160 = vadd.f32 0.0, %v1159
  %v1161 = vpop.f32.mrb[0].mxu0
  %v1162 = vpop.f32.mrb[0].mxu0
  %v1163 = vadd.f32 0.0, %v1162
  %v1164 = vpop.f32.mrb[0].mxu0
  %1165 = vmatprep.mubr.bf16.mxu0 %v1061
  %1166 = vmatmul.mubr.bf16.gmra.mrb[0].mxu0 %v1060
  %v1167 = vpop.f32.mrb[0].mxu0
  %v1168 = vadd.f32 0.0, %v1167
  %v1169 = vpop.f32.mrb[0].mxu0
  %v1170 = vpop.f32.mrb[0].mxu0
  %v1171 = vadd.f32 0.0, %v1170
  %v1172 = vpop.f32.mrb[0].mxu0
  %1173 = vmatprep.mubr.bf16.mxu0 %v1063
  %1174 = vmatmul.mubr.bf16.gmra.mrb[0].mxu0 %v1062
  %v1175 = vpop.f32.mrb[0].mxu0
  %v1176 = vadd.f32 0.0, %v1175
  %v1177 = vpop.f32.mrb[0].mxu0
  %v1178 = vpop.f32.mrb[0].mxu0
  %v1179 = vadd.f32 0.0, %v1178
  %v1180 = vpop.f32.mrb[0].mxu0
  %1181 = vmatprep.mubr.bf16.mxu0 %v1065
  %1182 = vmatmul.mubr.bf16.gmra.mrb[0].mxu0 %v1064
  %v1183 = vpop.f32.mrb[0].mxu0
  %v1184 = vadd.f32 0.0, %v1183
  %v1185 = vpop.f32.mrb[0].mxu0
  %v1186 = vpop.f32.mrb[0].mxu0
  %v1187 = vadd.f32 0.0, %v1186
  %v1188 = vpop.f32.mrb[0].mxu0
  %1189 = vmatprep.mubr.bf16.mxu0 %v1067
  %1190 = vmatmul.mubr.bf16.gmra.mrb[0].mxu0 %v1066
  %v1191 = vpop.f32.mrb[0].mxu0
  %v1192 = vadd.f32 0.0, %v1191
  %v1193 = vpop.f32.mrb[0].mxu0
  %v1194 = vpop.f32.mrb[0].mxu0
  %v1195 = vadd.f32 0.0, %v1194
  %v1196 = vpop.f32.mrb[0].mxu0
  %1197 = vmatprep.mubr.bf16.mxu0 %v1069
  %1198 = vmatmul.mubr.bf16.gmra.mrb[0].mxu0 %v1068
  %v1199 = vpop.f32.mrb[0].mxu0
  %v1200 = vadd.f32 0.0, %v1199
  %v1201 = vpop.f32.mrb[0].mxu0
  %v1202 = vpop.f32.mrb[0].mxu0
  %v1203 = vadd.f32 0.0, %v1202
  %v1204 = vpop.f32.mrb[0].mxu0
  %1205 = vmatprep.mubr.bf16.mxu0 %v1071
  %1206 = vmatmul.mubr.bf16.gmra.mrb[0].mxu0 %v1070
  %v1207 = vpop.f32.mrb[0].mxu0
  %v1208 = vadd.f32 0.0, %v1207
  %v1209 = vpop.f32.mrb[0].mxu0
  %v1210 = vpop.f32.mrb[0].mxu0
  %v1211 = vadd.f32 0.0, %v1210
  %v1212 = vpop.f32.mrb[0].mxu0
  %1213 = vmatprep.mubr.bf16.mxu0 %v1073
  %1214 = vmatmul.mubr.bf16.gmra.mrb[0].mxu0 %v1072
  %v1215 = vpop.f32.mrb[0].mxu0
  %v1216 = vadd.f32 0.0, %v1215
  %v1217 = vpop.f32.mrb[0].mxu0
  %v1218 = vpop.f32.mrb[0].mxu0
  %v1219 = vadd.f32 0.0, %v1218
  %v1220 = vpop.f32.mrb[0].mxu0
  %1221 = vmatprep.mubr.bf16.mxu0 %v1075
  %1222 = vmatmul.mubr.bf16.gmra.mrb[0].mxu0 %v1074
  %v1223 = vpop.f32.mrb[0].mxu0
  %v1224 = vadd.f32 0.0, %v1223
  %v1225 = vpop.f32.mrb[0].mxu0
  %v1226 = vpop.f32.mrb[0].mxu0
  %v1227 = vadd.f32 0.0, %v1226
  %v1228 = vpop.f32.mrb[0].mxu0
  %1229 = vmatprep.mubr.bf16.mxu0 %v1077
  %1230 = vmatmul.mubr.bf16.gmra.mrb[0].mxu0 %v1076
  %v1231 = vpop.f32.mrb[0].mxu0
  %v1232 = vadd.f32 0.0, %v1231
  %v1233 = vpop.f32.mrb[0].mxu0
  %v1234 = vpop.f32.mrb[0].mxu0
  %v1235 = vadd.f32 0.0, %v1234
  %v1236 = vpop.f32.mrb[0].mxu0
  %1237 = vmatprep.mubr.bf16.mxu0 %v1079
  %1238 = vmatmul.mubr.bf16.gmra.mrb[0].mxu0 %v1078
  %v1239 = vpop.f32.mrb[0].mxu0
  %v1240 = vadd.f32 0.0, %v1239
  %v1241 = vpop.f32.mrb[0].mxu0
  %v1242 = vpop.f32.mrb[0].mxu0
  %v1243 = vadd.f32 0.0, %v1242
  %v1244 = vpop.f32.mrb[0].mxu0
  %1245 = vmatprep.mubr.bf16.mxu0 %v1081
  %1246 = vmatmul.mubr.bf16.gmra.mrb[0].mxu0 %v1080
  %v1247 = vpop.f32.mrb[0].mxu0
  %v1248 = vadd.f32 0.0, %v1247
  %v1249 = vpop.f32.mrb[0].mxu0
  %v1250 = vpop.f32.mrb[0].mxu0
  %v1251 = vadd.f32 0.0, %v1250
  %v1252 = vpop.f32.mrb[0].mxu0
  %1253 = vmatprep.mubr.bf16.mxu0 %v1083
  %1254 = vmatmul.mubr.bf16.gmra.mrb[0].mxu0 %v1082
  %v1255 = vpop.f32.mrb[0].mxu0
  %v1256 = vadd.f32 0.0, %v1255
  %v1257 = vpop.f32.mrb[0].mxu0
  %v1258 = vpop.f32.mrb[0].mxu0
  %v1259 = vadd.f32 0.0, %v1258
  %v1260 = vpop.f32.mrb[0].mxu0
  %1261 = vdwg.mxu0
  %v1262 = vpack.c.bf16 %v1139, %v1136
  %v1263 = vpack.c.bf16 %v1147, %v1144
  %v1264 = vpack.c.bf16 %v1155, %v1152
  %v1265 = vpack.c.bf16 %v1163, %v1160
  %v1266 = vpack.c.bf16 %v1171, %v1168
  %v1267 = vpack.c.bf16 %v1179, %v1176
  %v1268 = vpack.c.bf16 %v1187, %v1184
  %v1269 = vpack.c.bf16 %v1195, %v1192
  %v1270 = vpack.c.bf16 %v1203, %v1200
  %v1271 = vpack.c.bf16 %v1211, %v1208
  %v1272 = vpack.c.bf16 %v1219, %v1216
  %v1273 = vpack.c.bf16 %v1227, %v1224
  %v1274 = vpack.c.bf16 %v1235, %v1232
  %v1275 = vpack.c.bf16 %v1243, %v1240
  %v1276 = vpack.c.bf16 %v1251, %v1248
  %v1277 = vpack.c.bf16 %v1259, %v1256
  %v1279 = vlaneseq
  %v1280 = vshrl.u32 %v1279, 7
  %v1281 = vsub.s32 0, %v1280
  %v1282 = vrot.slane %v1100, %v1281
  %v1300 = vunpack.c.l.b16 %v1084
  %v1301 = vunpack.c.l.b16 %v1085
  %v1302 = vunpack.c.l.b16 %v1086
  %v1303 = vunpack.c.l.b16 %v1087
  %v1304 = vunpack.c.l.b16 %v1088
  %v1305 = vunpack.c.l.b16 %v1089
  %v1306 = vunpack.c.l.b16 %v1090
  %v1307 = vunpack.c.l.b16 %v1091
  %v1308 = vunpack.c.l.b16 %v1092
  %v1309 = vunpack.c.l.b16 %v1093
  %v1310 = vunpack.c.l.b16 %v1094
  %v1311 = vunpack.c.l.b16 %v1095
  %v1312 = vunpack.c.l.b16 %v1096
  %v1313 = vunpack.c.l.b16 %v1097
  %v1314 = vunpack.c.l.b16 %v1098
  %v1315 = vunpack.c.l.b16 %v1099
  %v1316 = vpack.c.b16 %v1301, %v1300
  %v1317 = vpack.c.b16 %v1303, %v1302
  %v1318 = vpack.c.b16 %v1305, %v1304
  %v1319 = vpack.c.b16 %v1307, %v1306
  %v1320 = vpack.c.b16 %v1309, %v1308
  %v1321 = vpack.c.b16 %v1311, %v1310
  %v1322 = vpack.c.b16 %v1313, %v1312
  %v1323 = vpack.c.b16 %v1315, %v1314
  %1332 = vmatprep.subr.bf16.mxu0 0
  %1333 = vmatpush1.bf16.msra.mxu0 %v1316
  %1334 = vmatprep.subr.bf16.mxu0 0
  %1335 = vmatpush1.bf16.msra.mxu0 %v1317
  %1336 = vmatprep.subr.bf16.mxu0 0
  %1337 = vmatpush1.bf16.msra.mxu0 %v1318
  %1338 = vmatprep.subr.bf16.mxu0 0
  %1339 = vmatpush1.bf16.msra.mxu0 %v1319
  %1340 = vmatprep.subr.bf16.mxu0 0
  %1341 = vmatpush1.bf16.msra.mxu0 %v1320
  %1342 = vmatprep.subr.bf16.mxu0 0
  %1343 = vmatpush1.bf16.msra.mxu0 %v1321
  %1344 = vmatprep.subr.bf16.mxu0 0
  %1345 = vmatpush1.bf16.msra.mxu0 %v1322
  %1346 = vmatprep.subr.bf16.mxu0 0
  %1347 = vmatpush1.bf16.msra.mxu0 %v1323
  %1348 = vmatprep.subr.bf16.mxu0 0
  %1349 = vmatpush1.bf16.msra.mxu0 0
  %1350 = vmatprep.subr.bf16.mxu0 0
  %1351 = vmatpush1.bf16.msra.mxu0 0
  %1352 = vmatprep.subr.bf16.mxu0 0
  %1353 = vmatpush1.bf16.msra.mxu0 0
  %1354 = vmatprep.subr.bf16.mxu0 0
  %1355 = vmatpush1.bf16.msra.mxu0 0
  %1356 = vmatprep.subr.bf16.mxu0 0
  %1357 = vmatpush1.bf16.msra.mxu0 0
  %1358 = vmatprep.subr.bf16.mxu0 0
  %1359 = vmatpush1.bf16.msra.mxu0 0
  %1360 = vmatprep.subr.bf16.mxu0 0
  %1361 = vmatpush1.bf16.msra.mxu0 0
  %1362 = vmatprep.subr.bf16.mxu0 0
  %1363 = vmatpush1.bf16.msra.mxu0 0
  %1364 = vmatprep.mubr.bf16.mxu0 0
  %1365 = vmatmul.mubr.bf16.gmra.mrb[0].mxu0 %v1262
  %v1366 = vpop.f32.mrb[0].mxu0
  %v1367 = vadd.f32 %v1282, %v1366
  %v1368 = vpop.f32.mrb[0].mxu0
  %v1369 = vpop.f32.mrb[0].mxu0
  %v1370 = vadd.f32 %v1282, %v1369
  %v1371 = vpop.f32.mrb[0].mxu0
  %1372 = vmatprep.mubr.bf16.mxu0 0
  %1373 = vmatmul.mubr.bf16.gmra.mrb[0].mxu0 %v1263
  %v1374 = vpop.f32.mrb[0].mxu0
  %v1375 = vadd.f32 %v1282, %v1374
  %v1376 = vpop.f32.mrb[0].mxu0
  %v1377 = vpop.f32.mrb[0].mxu0
  %v1378 = vadd.f32 %v1282, %v1377
  %v1379 = vpop.f32.mrb[0].mxu0
  %1380 = vmatprep.mubr.bf16.mxu0 0
  %1381 = vmatmul.mubr.bf16.gmra.mrb[0].mxu0 %v1264
  %v1382 = vpop.f32.mrb[0].mxu0
  %v1383 = vadd.f32 %v1282, %v1382
  %v1384 = vpop.f32.mrb[0].mxu0
  %v1385 = vpop.f32.mrb[0].mxu0
  %v1386 = vadd.f32 %v1282, %v1385
  %v1387 = vpop.f32.mrb[0].mxu0
  %1388 = vmatprep.mubr.bf16.mxu0 0
  %1389 = vmatmul.mubr.bf16.gmra.mrb[0].mxu0 %v1265
  %v1390 = vpop.f32.mrb[0].mxu0
  %v1391 = vadd.f32 %v1282, %v1390
  %v1392 = vpop.f32.mrb[0].mxu0
  %v1393 = vpop.f32.mrb[0].mxu0
  %v1394 = vadd.f32 %v1282, %v1393
  %v1395 = vpop.f32.mrb[0].mxu0
  %1396 = vmatprep.mubr.bf16.mxu0 0
  %1397 = vmatmul.mubr.bf16.gmra.mrb[0].mxu0 %v1266
  %v1398 = vpop.f32.mrb[0].mxu0
  %v1399 = vadd.f32 %v1282, %v1398
  %v1400 = vpop.f32.mrb[0].mxu0
  %v1401 = vpop.f32.mrb[0].mxu0
  %v1402 = vadd.f32 %v1282, %v1401
  %v1403 = vpop.f32.mrb[0].mxu0
  %1404 = vmatprep.mubr.bf16.mxu0 0
  %1405 = vmatmul.mubr.bf16.gmra.mrb[0].mxu0 %v1267
  %v1406 = vpop.f32.mrb[0].mxu0
  %v1407 = vadd.f32 %v1282, %v1406
  %v1408 = vpop.f32.mrb[0].mxu0
  %v1409 = vpop.f32.mrb[0].mxu0
  %v1410 = vadd.f32 %v1282, %v1409
  %v1411 = vpop.f32.mrb[0].mxu0
  %1412 = vmatprep.mubr.bf16.mxu0 0
  %1413 = vmatmul.mubr.bf16.gmra.mrb[0].mxu0 %v1268
  %v1414 = vpop.f32.mrb[0].mxu0
  %v1415 = vadd.f32 %v1282, %v1414
  %v1416 = vpop.f32.mrb[0].mxu0
  %v1417 = vpop.f32.mrb[0].mxu0
  %v1418 = vadd.f32 %v1282, %v1417
  %v1419 = vpop.f32.mrb[0].mxu0
  %1420 = vmatprep.mubr.bf16.mxu0 0
  %1421 = vmatmul.mubr.bf16.gmra.mrb[0].mxu0 %v1269
  %v1422 = vpop.f32.mrb[0].mxu0
  %v1423 = vadd.f32 %v1282, %v1422
  %v1424 = vpop.f32.mrb[0].mxu0
  %v1425 = vpop.f32.mrb[0].mxu0
  %v1426 = vadd.f32 %v1282, %v1425
  %v1427 = vpop.f32.mrb[0].mxu0
  %1428 = vmatprep.mubr.bf16.mxu0 0
  %1429 = vmatmul.mubr.bf16.gmra.mrb[0].mxu0 %v1270
  %v1430 = vpop.f32.mrb[0].mxu0
  %v1431 = vadd.f32 %v1282, %v1430
  %v1432 = vpop.f32.mrb[0].mxu0
  %v1433 = vpop.f32.mrb[0].mxu0
  %v1434 = vadd.f32 %v1282, %v1433
  %v1435 = vpop.f32.mrb[0].mxu0
  %1436 = vmatprep.mubr.bf16.mxu0 0
  %1437 = vmatmul.mubr.bf16.gmra.mrb[0].mxu0 %v1271
  %v1438 = vpop.f32.mrb[0].mxu0
  %v1439 = vadd.f32 %v1282, %v1438
  %v1440 = vpop.f32.mrb[0].mxu0
  %v1441 = vpop.f32.mrb[0].mxu0
  %v1442 = vadd.f32 %v1282, %v1441
  %v1443 = vpop.f32.mrb[0].mxu0
  %1444 = vmatprep.mubr.bf16.mxu0 0
  %1445 = vmatmul.mubr.bf16.gmra.mrb[0].mxu0 %v1272
  %v1446 = vpop.f32.mrb[0].mxu0
  %v1447 = vadd.f32 %v1282, %v1446
  %v1448 = vpop.f32.mrb[0].mxu0
  %v1449 = vpop.f32.mrb[0].mxu0
  %v1450 = vadd.f32 %v1282, %v1449
  %v1451 = vpop.f32.mrb[0].mxu0
  %1452 = vmatprep.mubr.bf16.mxu0 0
  %1453 = vmatmul.mubr.bf16.gmra.mrb[0].mxu0 %v1273
  %v1454 = vpop.f32.mrb[0].mxu0
  %v1455 = vadd.f32 %v1282, %v1454
  %v1456 = vpop.f32.mrb[0].mxu0
  %v1457 = vpop.f32.mrb[0].mxu0
  %v1458 = vadd.f32 %v1282, %v1457
  %v1459 = vpop.f32.mrb[0].mxu0
  %1460 = vmatprep.mubr.bf16.mxu0 0
  %1461 = vmatmul.mubr.bf16.gmra.mrb[0].mxu0 %v1274
  %v1462 = vpop.f32.mrb[0].mxu0
  %v1463 = vadd.f32 %v1282, %v1462
  %v1464 = vpop.f32.mrb[0].mxu0
  %v1465 = vpop.f32.mrb[0].mxu0
  %v1466 = vadd.f32 %v1282, %v1465
  %v1467 = vpop.f32.mrb[0].mxu0
  %1468 = vmatprep.mubr.bf16.mxu0 0
  %1469 = vmatmul.mubr.bf16.gmra.mrb[0].mxu0 %v1275
  %v1470 = vpop.f32.mrb[0].mxu0
  %v1471 = vadd.f32 %v1282, %v1470
  %v1472 = vpop.f32.mrb[0].mxu0
  %v1473 = vpop.f32.mrb[0].mxu0
  %v1474 = vadd.f32 %v1282, %v1473
  %v1475 = vpop.f32.mrb[0].mxu0
  %1476 = vmatprep.mubr.bf16.mxu0 0
  %1477 = vmatmul.mubr.bf16.gmra.mrb[0].mxu0 %v1276
  %v1478 = vpop.f32.mrb[0].mxu0
  %v1479 = vadd.f32 %v1282, %v1478
  %v1480 = vpop.f32.mrb[0].mxu0
  %v1481 = vpop.f32.mrb[0].mxu0
  %v1482 = vadd.f32 %v1282, %v1481
  %v1483 = vpop.f32.mrb[0].mxu0
  %1484 = vmatprep.mubr.bf16.mxu0 0
  %1485 = vmatmul.mubr.bf16.gmra.mrb[0].mxu0 %v1277
  %v1486 = vpop.f32.mrb[0].mxu0
  %v1487 = vadd.f32 %v1282, %v1486
  %v1488 = vpop.f32.mrb[0].mxu0
  %v1489 = vpop.f32.mrb[0].mxu0
  %v1490 = vadd.f32 %v1282, %v1489
  %v1491 = vpop.f32.mrb[0].mxu0
  %1492 = vdwg.mxu0
  %v1493 = vadd.f32 %v1367, %v956
  %v1494 = vadd.f32 %v1370, %v957
  %v1495 = vadd.f32 %v1375, %v958
  %v1496 = vadd.f32 %v1378, %v959
  %v1497 = vadd.f32 %v1383, %v960
  %v1498 = vadd.f32 %v1386, %v961
  %v1499 = vadd.f32 %v1391, %v962
  %v1500 = vadd.f32 %v1394, %v963
  %v1501 = vadd.f32 %v1399, %v964
  %v1502 = vadd.f32 %v1402, %v965
  %v1503 = vadd.f32 %v1407, %v966
  %v1504 = vadd.f32 %v1410, %v967
  %v1505 = vadd.f32 %v1415, %v968
  %v1506 = vadd.f32 %v1418, %v969
  %v1507 = vadd.f32 %v1423, %v970
  %v1508 = vadd.f32 %v1426, %v971
  %v1509 = vadd.f32 %v1431, %v972
  %v1510 = vadd.f32 %v1434, %v973
  %v1511 = vadd.f32 %v1439, %v974
  %v1512 = vadd.f32 %v1442, %v975
  %v1513 = vadd.f32 %v1447, %v976
  %v1514 = vadd.f32 %v1450, %v977
  %v1515 = vadd.f32 %v1455, %v978
  %v1516 = vadd.f32 %v1458, %v979
  %v1517 = vadd.f32 %v1463, %v980
  %v1518 = vadd.f32 %v1466, %v981
  %v1519 = vadd.f32 %v1471, %v982
  %v1520 = vadd.f32 %v1474, %v983
  %v1521 = vadd.f32 %v1479, %v984
  %v1522 = vadd.f32 %v1482, %v985
  %v1523 = vadd.f32 %v1487, %v986
  %v1524 = vadd.f32 %v1490, %v987
  %v1525 = vmax.f32 %v1493, 0.0
  %v1526 = vmax.f32 %v1494, 0.0
  %v1527 = vmax.f32 %v1495, 0.0
  %v1528 = vmax.f32 %v1496, 0.0
  %v1529 = vmax.f32 %v1497, 0.0
  %v1530 = vmax.f32 %v1498, 0.0
  %v1531 = vmax.f32 %v1499, 0.0
  %v1532 = vmax.f32 %v1500, 0.0
  %v1533 = vmax.f32 %v1501, 0.0
  %v1534 = vmax.f32 %v1502, 0.0
  %v1535 = vmax.f32 %v1503, 0.0
  %v1536 = vmax.f32 %v1504, 0.0
  %v1537 = vmax.f32 %v1505, 0.0
  %v1538 = vmax.f32 %v1506, 0.0
  %v1539 = vmax.f32 %v1507, 0.0
  %v1540 = vmax.f32 %v1508, 0.0
  %v1541 = vmax.f32 %v1509, 0.0
  %v1542 = vmax.f32 %v1510, 0.0
  %v1543 = vmax.f32 %v1511, 0.0
  %v1544 = vmax.f32 %v1512, 0.0
  %v1545 = vmax.f32 %v1513, 0.0
  %v1546 = vmax.f32 %v1514, 0.0
  %v1547 = vmax.f32 %v1515, 0.0
  %v1548 = vmax.f32 %v1516, 0.0
  %v1549 = vmax.f32 %v1517, 0.0
  %v1550 = vmax.f32 %v1518, 0.0
  %v1551 = vmax.f32 %v1519, 0.0
  %v1552 = vmax.f32 %v1520, 0.0
  %v1553 = vmax.f32 %v1521, 0.0
  %v1554 = vmax.f32 %v1522, 0.0
  %v1555 = vmax.f32 %v1523, 0.0
  %v1556 = vmax.f32 %v1524, 0.0
  %v1557 = vpack.c.bf16 %v1526, %v1525
  %v1558 = vpack.c.bf16 %v1528, %v1527
  %v1559 = vpack.c.bf16 %v1530, %v1529
  %v1560 = vpack.c.bf16 %v1532, %v1531
  %v1561 = vpack.c.bf16 %v1534, %v1533
  %v1562 = vpack.c.bf16 %v1536, %v1535
  %v1563 = vpack.c.bf16 %v1538, %v1537
  %v1564 = vpack.c.bf16 %v1540, %v1539
  %v1565 = vpack.c.bf16 %v1542, %v1541
  %v1566 = vpack.c.bf16 %v1544, %v1543
  %v1567 = vpack.c.bf16 %v1546, %v1545
  %v1568 = vpack.c.bf16 %v1548, %v1547
  %v1569 = vpack.c.bf16 %v1550, %v1549
  %v1570 = vpack.c.bf16 %v1552, %v1551
  %v1571 = vpack.c.bf16 %v1554, %v1553
  %v1572 = vpack.c.bf16 %v1556, %v1555
  %1573 = vmatprep.subr.bf16.mxu0 0
  %1574 = vmatpush1.bf16.msra.mxu0 %v1557
  %1575 = vmatprep.subr.bf16.mxu0 0
  %1576 = vmatpush1.bf16.msra.mxu0 %v1558
  %1577 = vmatprep.subr.bf16.mxu0 0
  %1578 = vmatpush1.bf16.msra.mxu0 %v1559
  %1579 = vmatprep.subr.bf16.mxu0 0
  %1580 = vmatpush1.bf16.msra.mxu0 %v1560
  %1581 = vmatprep.subr.bf16.mxu0 0
  %1582 = vmatpush1.bf16.msra.mxu0 %v1561
  %1583 = vmatprep.subr.bf16.mxu0 0
  %1584 = vmatpush1.bf16.msra.mxu0 %v1562
  %1585 = vmatprep.subr.bf16.mxu0 0
  %1586 = vmatpush1.bf16.msra.mxu0 %v1563
  %1587 = vmatprep.subr.bf16.mxu0 0
  %1588 = vmatpush1.bf16.msra.mxu0 %v1564
  %1589 = vmatprep.subr.bf16.mxu0 0
  %1590 = vmatpush1.bf16.msra.mxu0 %v1565
  %1591 = vmatprep.subr.bf16.mxu0 0
  %1592 = vmatpush1.bf16.msra.mxu0 %v1566
  %1593 = vmatprep.subr.bf16.mxu0 0
  %1594 = vmatpush1.bf16.msra.mxu0 %v1567
  %1595 = vmatprep.subr.bf16.mxu0 0
  %1596 = vmatpush1.bf16.msra.mxu0 %v1568
  %1597 = vmatprep.subr.bf16.mxu0 0
  %1598 = vmatpush1.bf16.msra.mxu0 %v1569
  %1599 = vmatprep.subr.bf16.mxu0 0
  %1600 = vmatpush1.bf16.msra.mxu0 %v1570
  %1601 = vmatprep.subr.bf16.mxu0 0
  %1602 = vmatpush1.bf16.msra.mxu0 %v1571
  %1603 = vmatprep.subr.bf16.mxu0 0
  %1604 = vmatpush1.bf16.msra.mxu0 %v1572
  %1605 = vmatprep.mubr.bf16.mxu0 %v1053
  %1606 = vmatmul.mubr.bf16.gmra.mrb[0].mxu0 %v1052
  %v1607 = vpop.f32.mrb[0].mxu0
  %v1608 = vadd.f32 0.0, %v1607
  %v1609 = vpop.f32.mrb[0].mxu0
  %v1610 = vpop.f32.mrb[0].mxu0
  %v1611 = vadd.f32 0.0, %v1610
  %v1612 = vpop.f32.mrb[0].mxu0
  %1613 = vmatprep.mubr.bf16.mxu0 %v1055
  %1614 = vmatmul.mubr.bf16.gmra.mrb[0].mxu0 %v1054
  %v1615 = vpop.f32.mrb[0].mxu0
  %v1616 = vadd.f32 0.0, %v1615
  %v1617 = vpop.f32.mrb[0].mxu0
  %v1618 = vpop.f32.mrb[0].mxu0
  %v1619 = vadd.f32 0.0, %v1618
  %v1620 = vpop.f32.mrb[0].mxu0
  %1621 = vmatprep.mubr.bf16.mxu0 %v1057
  %1622 = vmatmul.mubr.bf16.gmra.mrb[0].mxu0 %v1056
  %v1623 = vpop.f32.mrb[0].mxu0
  %v1624 = vadd.f32 0.0, %v1623
  %v1625 = vpop.f32.mrb[0].mxu0
  %v1626 = vpop.f32.mrb[0].mxu0
  %v1627 = vadd.f32 0.0, %v1626
  %v1628 = vpop.f32.mrb[0].mxu0
  %1629 = vmatprep.mubr.bf16.mxu0 %v1059
  %1630 = vmatmul.mubr.bf16.gmra.mrb[0].mxu0 %v1058
  %v1631 = vpop.f32.mrb[0].mxu0
  %v1632 = vadd.f32 0.0, %v1631
  %v1633 = vpop.f32.mrb[0].mxu0
  %v1634 = vpop.f32.mrb[0].mxu0
  %v1635 = vadd.f32 0.0, %v1634
  %v1636 = vpop.f32.mrb[0].mxu0
  %1637 = vmatprep.mubr.bf16.mxu0 %v1061
  %1638 = vmatmul.mubr.bf16.gmra.mrb[0].mxu0 %v1060
  %v1639 = vpop.f32.mrb[0].mxu0
  %v1640 = vadd.f32 0.0, %v1639
  %v1641 = vpop.f32.mrb[0].mxu0
  %v1642 = vpop.f32.mrb[0].mxu0
  %v1643 = vadd.f32 0.0, %v1642
  %v1644 = vpop.f32.mrb[0].mxu0
  %1645 = vmatprep.mubr.bf16.mxu0 %v1063
  %1646 = vmatmul.mubr.bf16.gmra.mrb[0].mxu0 %v1062
  %v1647 = vpop.f32.mrb[0].mxu0
  %v1648 = vadd.f32 0.0, %v1647
  %v1649 = vpop.f32.mrb[0].mxu0
  %v1650 = vpop.f32.mrb[0].mxu0
  %v1651 = vadd.f32 0.0, %v1650
  %v1652 = vpop.f32.mrb[0].mxu0
  %1653 = vmatprep.mubr.bf16.mxu0 %v1065
  %1654 = vmatmul.mubr.bf16.gmra.mrb[0].mxu0 %v1064
  %v1655 = vpop.f32.mrb[0].mxu0
  %v1656 = vadd.f32 0.0, %v1655
  %v1657 = vpop.f32.mrb[0].mxu0
  %v1658 = vpop.f32.mrb[0].mxu0
  %v1659 = vadd.f32 0.0, %v1658
  %v1660 = vpop.f32.mrb[0].mxu0
  %1661 = vmatprep.mubr.bf16.mxu0 %v1067
  %1662 = vmatmul.mubr.bf16.gmra.mrb[0].mxu0 %v1066
  %v1663 = vpop.f32.mrb[0].mxu0
  %v1664 = vadd.f32 0.0, %v1663
  %v1665 = vpop.f32.mrb[0].mxu0
  %v1666 = vpop.f32.mrb[0].mxu0
  %v1667 = vadd.f32 0.0, %v1666
  %v1668 = vpop.f32.mrb[0].mxu0
  %1669 = vmatprep.mubr.bf16.mxu0 %v1069
  %1670 = vmatmul.mubr.bf16.gmra.mrb[0].mxu0 %v1068
  %v1671 = vpop.f32.mrb[0].mxu0
  %v1672 = vadd.f32 0.0, %v1671
  %v1673 = vpop.f32.mrb[0].mxu0
  %v1674 = vpop.f32.mrb[0].mxu0
  %v1675 = vadd.f32 0.0, %v1674
  %v1676 = vpop.f32.mrb[0].mxu0
  %1677 = vmatprep.mubr.bf16.mxu0 %v1071
  %1678 = vmatmul.mubr.bf16.gmra.mrb[0].mxu0 %v1070
  %v1679 = vpop.f32.mrb[0].mxu0
  %v1680 = vadd.f32 0.0, %v1679
  %v1681 = vpop.f32.mrb[0].mxu0
  %v1682 = vpop.f32.mrb[0].mxu0
  %v1683 = vadd.f32 0.0, %v1682
  %v1684 = vpop.f32.mrb[0].mxu0
  %1685 = vmatprep.mubr.bf16.mxu0 %v1073
  %1686 = vmatmul.mubr.bf16.gmra.mrb[0].mxu0 %v1072
  %v1687 = vpop.f32.mrb[0].mxu0
  %v1688 = vadd.f32 0.0, %v1687
  %v1689 = vpop.f32.mrb[0].mxu0
  %v1690 = vpop.f32.mrb[0].mxu0
  %v1691 = vadd.f32 0.0, %v1690
  %v1692 = vpop.f32.mrb[0].mxu0
  %1693 = vmatprep.mubr.bf16.mxu0 %v1075
  %1694 = vmatmul.mubr.bf16.gmra.mrb[0].mxu0 %v1074
  %v1695 = vpop.f32.mrb[0].mxu0
  %v1696 = vadd.f32 0.0, %v1695
  %v1697 = vpop.f32.mrb[0].mxu0
  %v1698 = vpop.f32.mrb[0].mxu0
  %v1699 = vadd.f32 0.0, %v1698
  %v1700 = vpop.f32.mrb[0].mxu0
  %1701 = vmatprep.mubr.bf16.mxu0 %v1077
  %1702 = vmatmul.mubr.bf16.gmra.mrb[0].mxu0 %v1076
  %v1703 = vpop.f32.mrb[0].mxu0
  %v1704 = vadd.f32 0.0, %v1703
  %v1705 = vpop.f32.mrb[0].mxu0
  %v1706 = vpop.f32.mrb[0].mxu0
  %v1707 = vadd.f32 0.0, %v1706
  %v1708 = vpop.f32.mrb[0].mxu0
  %1709 = vmatprep.mubr.bf16.mxu0 %v1079
  %1710 = vmatmul.mubr.bf16.gmra.mrb[0].mxu0 %v1078
  %v1711 = vpop.f32.mrb[0].mxu0
  %v1712 = vadd.f32 0.0, %v1711
  %v1713 = vpop.f32.mrb[0].mxu0
  %v1714 = vpop.f32.mrb[0].mxu0
  %v1715 = vadd.f32 0.0, %v1714
  %v1716 = vpop.f32.mrb[0].mxu0
  %1717 = vmatprep.mubr.bf16.mxu0 %v1081
  %1718 = vmatmul.mubr.bf16.gmra.mrb[0].mxu0 %v1080
  %v1719 = vpop.f32.mrb[0].mxu0
  %v1720 = vadd.f32 0.0, %v1719
  %v1721 = vpop.f32.mrb[0].mxu0
  %v1722 = vpop.f32.mrb[0].mxu0
  %v1723 = vadd.f32 0.0, %v1722
  %v1724 = vpop.f32.mrb[0].mxu0
  %1725 = vmatprep.mubr.bf16.mxu0 %v1083
  %1726 = vmatmul.mubr.bf16.gmra.mrb[0].mxu0 %v1082
  %v1727 = vpop.f32.mrb[0].mxu0
  %v1728 = vadd.f32 0.0, %v1727
  %v1729 = vpop.f32.mrb[0].mxu0
  %v1730 = vpop.f32.mrb[0].mxu0
  %v1731 = vadd.f32 0.0, %v1730
  %v1732 = vpop.f32.mrb[0].mxu0
  %1733 = vdwg.mxu0
  %v1734 = vpack.c.bf16 %v1611, %v1608
  %v1735 = vpack.c.bf16 %v1619, %v1616
  %v1736 = vpack.c.bf16 %v1627, %v1624
  %v1737 = vpack.c.bf16 %v1635, %v1632
  %v1738 = vpack.c.bf16 %v1643, %v1640
  %v1739 = vpack.c.bf16 %v1651, %v1648
  %v1740 = vpack.c.bf16 %v1659, %v1656
  %v1741 = vpack.c.bf16 %v1667, %v1664
  %v1742 = vpack.c.bf16 %v1675, %v1672
  %v1743 = vpack.c.bf16 %v1683, %v1680
  %v1744 = vpack.c.bf16 %v1691, %v1688
  %v1745 = vpack.c.bf16 %v1699, %v1696
  %v1746 = vpack.c.bf16 %v1707, %v1704
  %v1747 = vpack.c.bf16 %v1715, %v1712
  %v1748 = vpack.c.bf16 %v1723, %v1720
  %v1749 = vpack.c.bf16 %v1731, %v1728
  %1750 = vmatprep.subr.bf16.mxu0 0
  %1751 = vmatpush1.bf16.msra.mxu0 %v1316
  %1752 = vmatprep.subr.bf16.mxu0 0
  %1753 = vmatpush1.bf16.msra.mxu0 %v1317
  %1754 = vmatprep.subr.bf16.mxu0 0
  %1755 = vmatpush1.bf16.msra.mxu0 %v1318
  %1756 = vmatprep.subr.bf16.mxu0 0
  %1757 = vmatpush1.bf16.msra.mxu0 %v1319
  %1758 = vmatprep.subr.bf16.mxu0 0
  %1759 = vmatpush1.bf16.msra.mxu0 %v1320
  %1760 = vmatprep.subr.bf16.mxu0 0
  %1761 = vmatpush1.bf16.msra.mxu0 %v1321
  %1762 = vmatprep.subr.bf16.mxu0 0
  %1763 = vmatpush1.bf16.msra.mxu0 %v1322
  %1764 = vmatprep.subr.bf16.mxu0 0
  %1765 = vmatpush1.bf16.msra.mxu0 %v1323
  %1766 = vmatprep.subr.bf16.mxu0 0
  %1767 = vmatpush1.bf16.msra.mxu0 0
  %1768 = vmatprep.subr.bf16.mxu0 0
  %1769 = vmatpush1.bf16.msra.mxu0 0
  %1770 = vmatprep.subr.bf16.mxu0 0
  %1771 = vmatpush1.bf16.msra.mxu0 0
  %1772 = vmatprep.subr.bf16.mxu0 0
  %1773 = vmatpush1.bf16.msra.mxu0 0
  %1774 = vmatprep.subr.bf16.mxu0 0
  %1775 = vmatpush1.bf16.msra.mxu0 0
  %1776 = vmatprep.subr.bf16.mxu0 0
  %1777 = vmatpush1.bf16.msra.mxu0 0
  %1778 = vmatprep.subr.bf16.mxu0 0
  %1779 = vmatpush1.bf16.msra.mxu0 0
  %1780 = vmatprep.subr.bf16.mxu0 0
  %1781 = vmatpush1.bf16.msra.mxu0 0
  %1782 = vmatprep.mubr.bf16.mxu0 0
  %1783 = vmatmul.mubr.bf16.gmra.mrb[0].mxu0 %v1734
  %v1784 = vpop.f32.mrb[0].mxu0
  %v1785 = vadd.f32 %v1282, %v1784
  %v1786 = vpop.f32.mrb[0].mxu0
  %v1787 = vpop.f32.mrb[0].mxu0
  %v1788 = vadd.f32 %v1282, %v1787
  %v1789 = vpop.f32.mrb[0].mxu0
  %1790 = vmatprep.mubr.bf16.mxu0 0
  %1791 = vmatmul.mubr.bf16.gmra.mrb[0].mxu0 %v1735
  %v1792 = vpop.f32.mrb[0].mxu0
  %v1793 = vadd.f32 %v1282, %v1792
  %v1794 = vpop.f32.mrb[0].mxu0
  %v1795 = vpop.f32.mrb[0].mxu0
  %v1796 = vadd.f32 %v1282, %v1795
  %v1797 = vpop.f32.mrb[0].mxu0
  %1798 = vmatprep.mubr.bf16.mxu0 0
  %1799 = vmatmul.mubr.bf16.gmra.mrb[0].mxu0 %v1736
  %v1800 = vpop.f32.mrb[0].mxu0
  %v1801 = vadd.f32 %v1282, %v1800
  %v1802 = vpop.f32.mrb[0].mxu0
  %v1803 = vpop.f32.mrb[0].mxu0
  %v1804 = vadd.f32 %v1282, %v1803
  %v1805 = vpop.f32.mrb[0].mxu0
  %1806 = vmatprep.mubr.bf16.mxu0 0
  %1807 = vmatmul.mubr.bf16.gmra.mrb[0].mxu0 %v1737
  %v1808 = vpop.f32.mrb[0].mxu0
  %v1809 = vadd.f32 %v1282, %v1808
  %v1810 = vpop.f32.mrb[0].mxu0
  %v1811 = vpop.f32.mrb[0].mxu0
  %v1812 = vadd.f32 %v1282, %v1811
  %v1813 = vpop.f32.mrb[0].mxu0
  %1814 = vmatprep.mubr.bf16.mxu0 0
  %1815 = vmatmul.mubr.bf16.gmra.mrb[0].mxu0 %v1738
  %v1816 = vpop.f32.mrb[0].mxu0
  %v1817 = vadd.f32 %v1282, %v1816
  %v1818 = vpop.f32.mrb[0].mxu0
  %v1819 = vpop.f32.mrb[0].mxu0
  %v1820 = vadd.f32 %v1282, %v1819
  %v1821 = vpop.f32.mrb[0].mxu0
  %1822 = vmatprep.mubr.bf16.mxu0 0
  %1823 = vmatmul.mubr.bf16.gmra.mrb[0].mxu0 %v1739
  %v1824 = vpop.f32.mrb[0].mxu0
  %v1825 = vadd.f32 %v1282, %v1824
  %v1826 = vpop.f32.mrb[0].mxu0
  %v1827 = vpop.f32.mrb[0].mxu0
  %v1828 = vadd.f32 %v1282, %v1827
  %v1829 = vpop.f32.mrb[0].mxu0
  %1830 = vmatprep.mubr.bf16.mxu0 0
  %1831 = vmatmul.mubr.bf16.gmra.mrb[0].mxu0 %v1740
  %v1832 = vpop.f32.mrb[0].mxu0
  %v1833 = vadd.f32 %v1282, %v1832
  %v1834 = vpop.f32.mrb[0].mxu0
  %v1835 = vpop.f32.mrb[0].mxu0
  %v1836 = vadd.f32 %v1282, %v1835
  %v1837 = vpop.f32.mrb[0].mxu0
  %1838 = vmatprep.mubr.bf16.mxu0 0
  %1839 = vmatmul.mubr.bf16.gmra.mrb[0].mxu0 %v1741
  %v1840 = vpop.f32.mrb[0].mxu0
  %v1841 = vadd.f32 %v1282, %v1840
  %v1842 = vpop.f32.mrb[0].mxu0
  %v1843 = vpop.f32.mrb[0].mxu0
  %v1844 = vadd.f32 %v1282, %v1843
  %v1845 = vpop.f32.mrb[0].mxu0
  %1846 = vmatprep.mubr.bf16.mxu0 0
  %1847 = vmatmul.mubr.bf16.gmra.mrb[0].mxu0 %v1742
  %v1848 = vpop.f32.mrb[0].mxu0
  %v1849 = vadd.f32 %v1282, %v1848
  %v1850 = vpop.f32.mrb[0].mxu0
  %v1851 = vpop.f32.mrb[0].mxu0
  %v1852 = vadd.f32 %v1282, %v1851
  %v1853 = vpop.f32.mrb[0].mxu0
  %1854 = vmatprep.mubr.bf16.mxu0 0
  %1855 = vmatmul.mubr.bf16.gmra.mrb[0].mxu0 %v1743
  %v1856 = vpop.f32.mrb[0].mxu0
  %v1857 = vadd.f32 %v1282, %v1856
  %v1858 = vpop.f32.mrb[0].mxu0
  %v1859 = vpop.f32.mrb[0].mxu0
  %v1860 = vadd.f32 %v1282, %v1859
  %v1861 = vpop.f32.mrb[0].mxu0
  %1862 = vmatprep.mubr.bf16.mxu0 0
  %1863 = vmatmul.mubr.bf16.gmra.mrb[0].mxu0 %v1744
  %v1864 = vpop.f32.mrb[0].mxu0
  %v1865 = vadd.f32 %v1282, %v1864
  %v1866 = vpop.f32.mrb[0].mxu0
  %v1867 = vpop.f32.mrb[0].mxu0
  %v1868 = vadd.f32 %v1282, %v1867
  %v1869 = vpop.f32.mrb[0].mxu0
  %1870 = vmatprep.mubr.bf16.mxu0 0
  %1871 = vmatmul.mubr.bf16.gmra.mrb[0].mxu0 %v1745
  %v1872 = vpop.f32.mrb[0].mxu0
  %v1873 = vadd.f32 %v1282, %v1872
  %v1874 = vpop.f32.mrb[0].mxu0
  %v1875 = vpop.f32.mrb[0].mxu0
  %v1876 = vadd.f32 %v1282, %v1875
  %v1877 = vpop.f32.mrb[0].mxu0
  %1878 = vmatprep.mubr.bf16.mxu0 0
  %1879 = vmatmul.mubr.bf16.gmra.mrb[0].mxu0 %v1746
  %v1880 = vpop.f32.mrb[0].mxu0
  %v1881 = vadd.f32 %v1282, %v1880
  %v1882 = vpop.f32.mrb[0].mxu0
  %v1883 = vpop.f32.mrb[0].mxu0
  %v1884 = vadd.f32 %v1282, %v1883
  %v1885 = vpop.f32.mrb[0].mxu0
  %1886 = vmatprep.mubr.bf16.mxu0 0
  %1887 = vmatmul.mubr.bf16.gmra.mrb[0].mxu0 %v1747
  %v1888 = vpop.f32.mrb[0].mxu0
  %v1889 = vadd.f32 %v1282, %v1888
  %v1890 = vpop.f32.mrb[0].mxu0
  %v1891 = vpop.f32.mrb[0].mxu0
  %v1892 = vadd.f32 %v1282, %v1891
  %v1893 = vpop.f32.mrb[0].mxu0
  %1894 = vmatprep.mubr.bf16.mxu0 0
  %1895 = vmatmul.mubr.bf16.gmra.mrb[0].mxu0 %v1748
  %v1896 = vpop.f32.mrb[0].mxu0
  %v1897 = vadd.f32 %v1282, %v1896
  %v1898 = vpop.f32.mrb[0].mxu0
  %v1899 = vpop.f32.mrb[0].mxu0
  %v1900 = vadd.f32 %v1282, %v1899
  %v1901 = vpop.f32.mrb[0].mxu0
  %1902 = vmatprep.mubr.bf16.mxu0 0
  %1903 = vmatmul.mubr.bf16.gmra.mrb[0].mxu0 %v1749
  %v1904 = vpop.f32.mrb[0].mxu0
  %v1905 = vadd.f32 %v1282, %v1904
  %v1906 = vpop.f32.mrb[0].mxu0
  %v1907 = vpop.f32.mrb[0].mxu0
  %v1908 = vadd.f32 %v1282, %v1907
  %v1909 = vpop.f32.mrb[0].mxu0
  %1910 = vdwg.mxu0
  %v1911 = vadd.f32 %v1785, %v956
  %v1912 = vadd.f32 %v1788, %v957
  %v1913 = vadd.f32 %v1793, %v958
  %v1914 = vadd.f32 %v1796, %v959
  %v1915 = vadd.f32 %v1801, %v960
  %v1916 = vadd.f32 %v1804, %v961
  %v1917 = vadd.f32 %v1809, %v962
  %v1918 = vadd.f32 %v1812, %v963
  %v1919 = vadd.f32 %v1817, %v964
  %v1920 = vadd.f32 %v1820, %v965
  %v1921 = vadd.f32 %v1825, %v966
  %v1922 = vadd.f32 %v1828, %v967
  %v1923 = vadd.f32 %v1833, %v968
  %v1924 = vadd.f32 %v1836, %v969
  %v1925 = vadd.f32 %v1841, %v970
  %v1926 = vadd.f32 %v1844, %v971
  %v1927 = vadd.f32 %v1849, %v972
  %v1928 = vadd.f32 %v1852, %v973
  %v1929 = vadd.f32 %v1857, %v974
  %v1930 = vadd.f32 %v1860, %v975
  %v1931 = vadd.f32 %v1865, %v976
  %v1932 = vadd.f32 %v1868, %v977
  %v1933 = vadd.f32 %v1873, %v978
  %v1934 = vadd.f32 %v1876, %v979
  %v1935 = vadd.f32 %v1881, %v980
  %v1936 = vadd.f32 %v1884, %v981
  %v1937 = vadd.f32 %v1889, %v982
  %v1938 = vadd.f32 %v1892, %v983
  %v1939 = vadd.f32 %v1897, %v984
  %v1940 = vadd.f32 %v1900, %v985
  %v1941 = vadd.f32 %v1905, %v986
  %v1942 = vadd.f32 %v1908, %v987
  %v1943 = vmax.f32 %v1911, 0.0
  %v1944 = vmax.f32 %v1912, 0.0
  %v1945 = vmax.f32 %v1913, 0.0
  %v1946 = vmax.f32 %v1914, 0.0
  %v1947 = vmax.f32 %v1915, 0.0
  %v1948 = vmax.f32 %v1916, 0.0
  %v1949 = vmax.f32 %v1917, 0.0
  %v1950 = vmax.f32 %v1918, 0.0
  %v1951 = vmax.f32 %v1919, 0.0
  %v1952 = vmax.f32 %v1920, 0.0
  %v1953 = vmax.f32 %v1921, 0.0
  %v1954 = vmax.f32 %v1922, 0.0
  %v1955 = vmax.f32 %v1923, 0.0
  %v1956 = vmax.f32 %v1924, 0.0
  %v1957 = vmax.f32 %v1925, 0.0
  %v1958 = vmax.f32 %v1926, 0.0
  %v1959 = vmax.f32 %v1927, 0.0
  %v1960 = vmax.f32 %v1928, 0.0
  %v1961 = vmax.f32 %v1929, 0.0
  %v1962 = vmax.f32 %v1930, 0.0
  %v1963 = vmax.f32 %v1931, 0.0
  %v1964 = vmax.f32 %v1932, 0.0
  %v1965 = vmax.f32 %v1933, 0.0
  %v1966 = vmax.f32 %v1934, 0.0
  %v1967 = vmax.f32 %v1935, 0.0
  %v1968 = vmax.f32 %v1936, 0.0
  %v1969 = vmax.f32 %v1937, 0.0
  %v1970 = vmax.f32 %v1938, 0.0
  %v1971 = vmax.f32 %v1939, 0.0
  %v1972 = vmax.f32 %v1940, 0.0
  %v1973 = vmax.f32 %v1941, 0.0
  %v1974 = vmax.f32 %v1942, 0.0
  %v1975 = vpack.c.bf16 %v1944, %v1943
  %v1976 = vpack.c.bf16 %v1946, %v1945
  %v1977 = vpack.c.bf16 %v1948, %v1947
  %v1978 = vpack.c.bf16 %v1950, %v1949
  %v1979 = vpack.c.bf16 %v1952, %v1951
  %v1980 = vpack.c.bf16 %v1954, %v1953
  %v1981 = vpack.c.bf16 %v1956, %v1955
  %v1982 = vpack.c.bf16 %v1958, %v1957
  %v1983 = vpack.c.bf16 %v1960, %v1959
  %v1984 = vpack.c.bf16 %v1962, %v1961
  %v1985 = vpack.c.bf16 %v1964, %v1963
  %v1986 = vpack.c.bf16 %v1966, %v1965
  %v1987 = vpack.c.bf16 %v1968, %v1967
  %v1988 = vpack.c.bf16 %v1970, %v1969
  %v1989 = vpack.c.bf16 %v1972, %v1971
  %v1990 = vpack.c.bf16 %v1974, %v1973
  %1991 = vmatprep.subr.bf16.mxu0 0
  %1992 = vmatpush1.bf16.msra.mxu0 %v1975
  %1993 = vmatprep.subr.bf16.mxu0 0
  %1994 = vmatpush1.bf16.msra.mxu0 %v1976
  %1995 = vmatprep.subr.bf16.mxu0 0
  %1996 = vmatpush1.bf16.msra.mxu0 %v1977
  %1997 = vmatprep.subr.bf16.mxu0 0
  %1998 = vmatpush1.bf16.msra.mxu0 %v1978
  %1999 = vmatprep.subr.bf16.mxu0 0
  %2000 = vmatpush1.bf16.msra.mxu0 %v1979
  %2001 = vmatprep.subr.bf16.mxu0 0
  %2002 = vmatpush1.bf16.msra.mxu0 %v1980
  %2003 = vmatprep.subr.bf16.mxu0 0
  %2004 = vmatpush1.bf16.msra.mxu0 %v1981
  %2005 = vmatprep.subr.bf16.mxu0 0
  %2006 = vmatpush1.bf16.msra.mxu0 %v1982
  %2007 = vmatprep.subr.bf16.mxu0 0
  %2008 = vmatpush1.bf16.msra.mxu0 %v1983
  %2009 = vmatprep.subr.bf16.mxu0 0
  %2010 = vmatpush1.bf16.msra.mxu0 %v1984
  %2011 = vmatprep.subr.bf16.mxu0 0
  %2012 = vmatpush1.bf16.msra.mxu0 %v1985
  %2013 = vmatprep.subr.bf16.mxu0 0
  %2014 = vmatpush1.bf16.msra.mxu0 %v1986
  %2015 = vmatprep.subr.bf16.mxu0 0
  %2016 = vmatpush1.bf16.msra.mxu0 %v1987
  %2017 = vmatprep.subr.bf16.mxu0 0
  %2018 = vmatpush1.bf16.msra.mxu0 %v1988
  %2019 = vmatprep.subr.bf16.mxu0 0
  %2020 = vmatpush1.bf16.msra.mxu0 %v1989
  %2021 = vmatprep.subr.bf16.mxu0 0
  %2022 = vmatpush1.bf16.msra.mxu0 %v1990
  %2023 = vmatprep.mubr.bf16.mxu0 %v1053
  %2024 = vmatmul.mubr.bf16.gmra.mrb[0].mxu0 %v1052
  %v2025 = vpop.f32.mrb[0].mxu0
  %v2026 = vadd.f32 0.0, %v2025
  %v2027 = vpop.f32.mrb[0].mxu0
  %v2028 = vpop.f32.mrb[0].mxu0
  %v2029 = vadd.f32 0.0, %v2028
  %v2030 = vpop.f32.mrb[0].mxu0
  %2031 = vmatprep.mubr.bf16.mxu0 %v1055
  %2032 = vmatmul.mubr.bf16.gmra.mrb[0].mxu0 %v1054
  %v2033 = vpop.f32.mrb[0].mxu0
  %v2034 = vadd.f32 0.0, %v2033
  %v2035 = vpop.f32.mrb[0].mxu0
  %v2036 = vpop.f32.mrb[0].mxu0
  %v2037 = vadd.f32 0.0, %v2036
  %v2038 = vpop.f32.mrb[0].mxu0
  %2039 = vmatprep.mubr.bf16.mxu0 %v1057
  %2040 = vmatmul.mubr.bf16.gmra.mrb[0].mxu0 %v1056
  %v2041 = vpop.f32.mrb[0].mxu0
  %v2042 = vadd.f32 0.0, %v2041
  %v2043 = vpop.f32.mrb[0].mxu0
  %v2044 = vpop.f32.mrb[0].mxu0
  %v2045 = vadd.f32 0.0, %v2044
  %v2046 = vpop.f32.mrb[0].mxu0
  %2047 = vmatprep.mubr.bf16.mxu0 %v1059
  %2048 = vmatmul.mubr.bf16.gmra.mrb[0].mxu0 %v1058
  %v2049 = vpop.f32.mrb[0].mxu0
  %v2050 = vadd.f32 0.0, %v2049
  %v2051 = vpop.f32.mrb[0].mxu0
  %v2052 = vpop.f32.mrb[0].mxu0
  %v2053 = vadd.f32 0.0, %v2052
  %v2054 = vpop.f32.mrb[0].mxu0
  %2055 = vmatprep.mubr.bf16.mxu0 %v1061
  %2056 = vmatmul.mubr.bf16.gmra.mrb[0].mxu0 %v1060
  %v2057 = vpop.f32.mrb[0].mxu0
  %v2058 = vadd.f32 0.0, %v2057
  %v2059 = vpop.f32.mrb[0].mxu0
  %v2060 = vpop.f32.mrb[0].mxu0
  %v2061 = vadd.f32 0.0, %v2060
  %v2062 = vpop.f32.mrb[0].mxu0
  %2063 = vmatprep.mubr.bf16.mxu0 %v1063
  %2064 = vmatmul.mubr.bf16.gmra.mrb[0].mxu0 %v1062
  %v2065 = vpop.f32.mrb[0].mxu0
  %v2066 = vadd.f32 0.0, %v2065
  %v2067 = vpop.f32.mrb[0].mxu0
  %v2068 = vpop.f32.mrb[0].mxu0
  %v2069 = vadd.f32 0.0, %v2068
  %v2070 = vpop.f32.mrb[0].mxu0
  %2071 = vmatprep.mubr.bf16.mxu0 %v1065
  %2072 = vmatmul.mubr.bf16.gmra.mrb[0].mxu0 %v1064
  %v2073 = vpop.f32.mrb[0].mxu0
  %v2074 = vadd.f32 0.0, %v2073
  %v2075 = vpop.f32.mrb[0].mxu0
  %v2076 = vpop.f32.mrb[0].mxu0
  %v2077 = vadd.f32 0.0, %v2076
  %v2078 = vpop.f32.mrb[0].mxu0
  %2079 = vmatprep.mubr.bf16.mxu0 %v1067
  %2080 = vmatmul.mubr.bf16.gmra.mrb[0].mxu0 %v1066
  %v2081 = vpop.f32.mrb[0].mxu0
  %v2082 = vadd.f32 0.0, %v2081
  %v2083 = vpop.f32.mrb[0].mxu0
  %v2084 = vpop.f32.mrb[0].mxu0
  %v2085 = vadd.f32 0.0, %v2084
  %v2086 = vpop.f32.mrb[0].mxu0
  %2087 = vmatprep.mubr.bf16.mxu0 %v1069
  %2088 = vmatmul.mubr.bf16.gmra.mrb[0].mxu0 %v1068
  %v2089 = vpop.f32.mrb[0].mxu0
  %v2090 = vadd.f32 0.0, %v2089
  %v2091 = vpop.f32.mrb[0].mxu0
  %v2092 = vpop.f32.mrb[0].mxu0
  %v2093 = vadd.f32 0.0, %v2092
  %v2094 = vpop.f32.mrb[0].mxu0
  %2095 = vmatprep.mubr.bf16.mxu0 %v1071
  %2096 = vmatmul.mubr.bf16.gmra.mrb[0].mxu0 %v1070
  %v2097 = vpop.f32.mrb[0].mxu0
  %v2098 = vadd.f32 0.0, %v2097
  %v2099 = vpop.f32.mrb[0].mxu0
  %v2100 = vpop.f32.mrb[0].mxu0
  %v2101 = vadd.f32 0.0, %v2100
  %v2102 = vpop.f32.mrb[0].mxu0
  %2103 = vmatprep.mubr.bf16.mxu0 %v1073
  %2104 = vmatmul.mubr.bf16.gmra.mrb[0].mxu0 %v1072
  %v2105 = vpop.f32.mrb[0].mxu0
  %v2106 = vadd.f32 0.0, %v2105
  %v2107 = vpop.f32.mrb[0].mxu0
  %v2108 = vpop.f32.mrb[0].mxu0
  %v2109 = vadd.f32 0.0, %v2108
  %v2110 = vpop.f32.mrb[0].mxu0
  %2111 = vmatprep.mubr.bf16.mxu0 %v1075
  %2112 = vmatmul.mubr.bf16.gmra.mrb[0].mxu0 %v1074
  %v2113 = vpop.f32.mrb[0].mxu0
  %v2114 = vadd.f32 0.0, %v2113
  %v2115 = vpop.f32.mrb[0].mxu0
  %v2116 = vpop.f32.mrb[0].mxu0
  %v2117 = vadd.f32 0.0, %v2116
  %v2118 = vpop.f32.mrb[0].mxu0
  %2119 = vmatprep.mubr.bf16.mxu0 %v1077
  %2120 = vmatmul.mubr.bf16.gmra.mrb[0].mxu0 %v1076
  %v2121 = vpop.f32.mrb[0].mxu0
  %v2122 = vadd.f32 0.0, %v2121
  %v2123 = vpop.f32.mrb[0].mxu0
  %v2124 = vpop.f32.mrb[0].mxu0
  %v2125 = vadd.f32 0.0, %v2124
  %v2126 = vpop.f32.mrb[0].mxu0
  %2127 = vmatprep.mubr.bf16.mxu0 %v1079
  %2128 = vmatmul.mubr.bf16.gmra.mrb[0].mxu0 %v1078
  %v2129 = vpop.f32.mrb[0].mxu0
  %v2130 = vadd.f32 0.0, %v2129
  %v2131 = vpop.f32.mrb[0].mxu0
  %v2132 = vpop.f32.mrb[0].mxu0
  %v2133 = vadd.f32 0.0, %v2132
  %v2134 = vpop.f32.mrb[0].mxu0
  %2135 = vmatprep.mubr.bf16.mxu0 %v1081
  %2136 = vmatmul.mubr.bf16.gmra.mrb[0].mxu0 %v1080
  %v2137 = vpop.f32.mrb[0].mxu0
  %v2138 = vadd.f32 0.0, %v2137
  %v2139 = vpop.f32.mrb[0].mxu0
  %v2140 = vpop.f32.mrb[0].mxu0
  %v2141 = vadd.f32 0.0, %v2140
  %v2142 = vpop.f32.mrb[0].mxu0
  %2143 = vmatprep.mubr.bf16.mxu0 %v1083
  %2144 = vmatmul.mubr.bf16.gmra.mrb[0].mxu0 %v1082
  %v2145 = vpop.f32.mrb[0].mxu0
  %v2146 = vadd.f32 0.0, %v2145
  %v2147 = vpop.f32.mrb[0].mxu0
  %v2148 = vpop.f32.mrb[0].mxu0
  %v2149 = vadd.f32 0.0, %v2148
  %v2150 = vpop.f32.mrb[0].mxu0
  %2151 = vdwg.mxu0
  %v2152 = vpack.c.bf16 %v2029, %v2026
  %v2153 = vpack.c.bf16 %v2037, %v2034
  %v2154 = vpack.c.bf16 %v2045, %v2042
  %v2155 = vpack.c.bf16 %v2053, %v2050
  %v2156 = vpack.c.bf16 %v2061, %v2058
  %v2157 = vpack.c.bf16 %v2069, %v2066
  %v2158 = vpack.c.bf16 %v2077, %v2074
  %v2159 = vpack.c.bf16 %v2085, %v2082
  %v2160 = vpack.c.bf16 %v2093, %v2090
  %v2161 = vpack.c.bf16 %v2101, %v2098
  %v2162 = vpack.c.bf16 %v2109, %v2106
  %v2163 = vpack.c.bf16 %v2117, %v2114
  %v2164 = vpack.c.bf16 %v2125, %v2122
  %v2165 = vpack.c.bf16 %v2133, %v2130
  %v2166 = vpack.c.bf16 %v2141, %v2138
  %v2167 = vpack.c.bf16 %v2149, %v2146
  %2168 = vmatprep.subr.bf16.mxu0 0
  %2169 = vmatpush1.bf16.msra.mxu0 %v1316
  %2170 = vmatprep.subr.bf16.mxu0 0
  %2171 = vmatpush1.bf16.msra.mxu0 %v1317
  %2172 = vmatprep.subr.bf16.mxu0 0
  %2173 = vmatpush1.bf16.msra.mxu0 %v1318
  %2174 = vmatprep.subr.bf16.mxu0 0
  %2175 = vmatpush1.bf16.msra.mxu0 %v1319
  %2176 = vmatprep.subr.bf16.mxu0 0
  %2177 = vmatpush1.bf16.msra.mxu0 %v1320
  %2178 = vmatprep.subr.bf16.mxu0 0
  %2179 = vmatpush1.bf16.msra.mxu0 %v1321
  %2180 = vmatprep.subr.bf16.mxu0 0
  %2181 = vmatpush1.bf16.msra.mxu0 %v1322
  %2182 = vmatprep.subr.bf16.mxu0 0
  %2183 = vmatpush1.bf16.msra.mxu0 %v1323
  %2184 = vmatprep.subr.bf16.mxu0 0
  %2185 = vmatpush1.bf16.msra.mxu0 0
  %2186 = vmatprep.subr.bf16.mxu0 0
  %2187 = vmatpush1.bf16.msra.mxu0 0
  %2188 = vmatprep.subr.bf16.mxu0 0
  %2189 = vmatpush1.bf16.msra.mxu0 0
  %2190 = vmatprep.subr.bf16.mxu0 0
  %2191 = vmatpush1.bf16.msra.mxu0 0
  %2192 = vmatprep.subr.bf16.mxu0 0
  %2193 = vmatpush1.bf16.msra.mxu0 0
  %2194 = vmatprep.subr.bf16.mxu0 0
  %2195 = vmatpush1.bf16.msra.mxu0 0
  %2196 = vmatprep.subr.bf16.mxu0 0
  %2197 = vmatpush1.bf16.msra.mxu0 0
  %2198 = vmatprep.subr.bf16.mxu0 0
  %2199 = vmatpush1.bf16.msra.mxu0 0
  %2200 = vmatprep.mubr.bf16.mxu0 0
  %2201 = vmatmul.mubr.bf16.gmra.mrb[0].mxu0 %v2152
  %v2202 = vpop.f32.mrb[0].mxu0
  %v2203 = vadd.f32 %v1282, %v2202
  %v2204 = vpop.f32.mrb[0].mxu0
  %v2205 = vpop.f32.mrb[0].mxu0
  %v2206 = vadd.f32 %v1282, %v2205
  %v2207 = vpop.f32.mrb[0].mxu0
  %2208 = vmatprep.mubr.bf16.mxu0 0
  %2209 = vmatmul.mubr.bf16.gmra.mrb[0].mxu0 %v2153
  %v2210 = vpop.f32.mrb[0].mxu0
  %v2211 = vadd.f32 %v1282, %v2210
  %v2212 = vpop.f32.mrb[0].mxu0
  %v2213 = vpop.f32.mrb[0].mxu0
  %v2214 = vadd.f32 %v1282, %v2213
  %v2215 = vpop.f32.mrb[0].mxu0
  %2216 = vmatprep.mubr.bf16.mxu0 0
  %2217 = vmatmul.mubr.bf16.gmra.mrb[0].mxu0 %v2154
  %v2218 = vpop.f32.mrb[0].mxu0
  %v2219 = vadd.f32 %v1282, %v2218
  %v2220 = vpop.f32.mrb[0].mxu0
  %v2221 = vpop.f32.mrb[0].mxu0
  %v2222 = vadd.f32 %v1282, %v2221
  %v2223 = vpop.f32.mrb[0].mxu0
  %2224 = vmatprep.mubr.bf16.mxu0 0
  %2225 = vmatmul.mubr.bf16.gmra.mrb[0].mxu0 %v2155
  %v2226 = vpop.f32.mrb[0].mxu0
  %v2227 = vadd.f32 %v1282, %v2226
  %v2228 = vpop.f32.mrb[0].mxu0
  %v2229 = vpop.f32.mrb[0].mxu0
  %v2230 = vadd.f32 %v1282, %v2229
  %v2231 = vpop.f32.mrb[0].mxu0
  %2232 = vmatprep.mubr.bf16.mxu0 0
  %2233 = vmatmul.mubr.bf16.gmra.mrb[0].mxu0 %v2156
  %v2234 = vpop.f32.mrb[0].mxu0
  %v2235 = vadd.f32 %v1282, %v2234
  %v2236 = vpop.f32.mrb[0].mxu0
  %v2237 = vpop.f32.mrb[0].mxu0
  %v2238 = vadd.f32 %v1282, %v2237
  %v2239 = vpop.f32.mrb[0].mxu0
  %2240 = vmatprep.mubr.bf16.mxu0 0
  %2241 = vmatmul.mubr.bf16.gmra.mrb[0].mxu0 %v2157
  %v2242 = vpop.f32.mrb[0].mxu0
  %v2243 = vadd.f32 %v1282, %v2242
  %v2244 = vpop.f32.mrb[0].mxu0
  %v2245 = vpop.f32.mrb[0].mxu0
  %v2246 = vadd.f32 %v1282, %v2245
  %v2247 = vpop.f32.mrb[0].mxu0
  %2248 = vmatprep.mubr.bf16.mxu0 0
  %2249 = vmatmul.mubr.bf16.gmra.mrb[0].mxu0 %v2158
  %v2250 = vpop.f32.mrb[0].mxu0
  %v2251 = vadd.f32 %v1282, %v2250
  %v2252 = vpop.f32.mrb[0].mxu0
  %v2253 = vpop.f32.mrb[0].mxu0
  %v2254 = vadd.f32 %v1282, %v2253
  %v2255 = vpop.f32.mrb[0].mxu0
  %2256 = vmatprep.mubr.bf16.mxu0 0
  %2257 = vmatmul.mubr.bf16.gmra.mrb[0].mxu0 %v2159
  %v2258 = vpop.f32.mrb[0].mxu0
  %v2259 = vadd.f32 %v1282, %v2258
  %v2260 = vpop.f32.mrb[0].mxu0
  %v2261 = vpop.f32.mrb[0].mxu0
  %v2262 = vadd.f32 %v1282, %v2261
  %v2263 = vpop.f32.mrb[0].mxu0
  %2264 = vmatprep.mubr.bf16.mxu0 0
  %2265 = vmatmul.mubr.bf16.gmra.mrb[0].mxu0 %v2160
  %v2266 = vpop.f32.mrb[0].mxu0
  %v2267 = vadd.f32 %v1282, %v2266
  %v2268 = vpop.f32.mrb[0].mxu0
  %v2269 = vpop.f32.mrb[0].mxu0
  %v2270 = vadd.f32 %v1282, %v2269
  %v2271 = vpop.f32.mrb[0].mxu0
  %2272 = vmatprep.mubr.bf16.mxu0 0
  %2273 = vmatmul.mubr.bf16.gmra.mrb[0].mxu0 %v2161
  %v2274 = vpop.f32.mrb[0].mxu0
  %v2275 = vadd.f32 %v1282, %v2274
  %v2276 = vpop.f32.mrb[0].mxu0
  %v2277 = vpop.f32.mrb[0].mxu0
  %v2278 = vadd.f32 %v1282, %v2277
  %v2279 = vpop.f32.mrb[0].mxu0
  %2280 = vmatprep.mubr.bf16.mxu0 0
  %2281 = vmatmul.mubr.bf16.gmra.mrb[0].mxu0 %v2162
  %v2282 = vpop.f32.mrb[0].mxu0
  %v2283 = vadd.f32 %v1282, %v2282
  %v2284 = vpop.f32.mrb[0].mxu0
  %v2285 = vpop.f32.mrb[0].mxu0
  %v2286 = vadd.f32 %v1282, %v2285
  %v2287 = vpop.f32.mrb[0].mxu0
  %2288 = vmatprep.mubr.bf16.mxu0 0
  %2289 = vmatmul.mubr.bf16.gmra.mrb[0].mxu0 %v2163
  %v2290 = vpop.f32.mrb[0].mxu0
  %v2291 = vadd.f32 %v1282, %v2290
  %v2292 = vpop.f32.mrb[0].mxu0
  %v2293 = vpop.f32.mrb[0].mxu0
  %v2294 = vadd.f32 %v1282, %v2293
  %v2295 = vpop.f32.mrb[0].mxu0
  %2296 = vmatprep.mubr.bf16.mxu0 0
  %2297 = vmatmul.mubr.bf16.gmra.mrb[0].mxu0 %v2164
  %v2298 = vpop.f32.mrb[0].mxu0
  %v2299 = vadd.f32 %v1282, %v2298
  %v2300 = vpop.f32.mrb[0].mxu0
  %v2301 = vpop.f32.mrb[0].mxu0
  %v2302 = vadd.f32 %v1282, %v2301
  %v2303 = vpop.f32.mrb[0].mxu0
  %2304 = vmatprep.mubr.bf16.mxu0 0
  %2305 = vmatmul.mubr.bf16.gmra.mrb[0].mxu0 %v2165
  %v2306 = vpop.f32.mrb[0].mxu0
  %v2307 = vadd.f32 %v1282, %v2306
  %v2308 = vpop.f32.mrb[0].mxu0
  %v2309 = vpop.f32.mrb[0].mxu0
  %v2310 = vadd.f32 %v1282, %v2309
  %v2311 = vpop.f32.mrb[0].mxu0
  %2312 = vmatprep.mubr.bf16.mxu0 0
  %2313 = vmatmul.mubr.bf16.gmra.mrb[0].mxu0 %v2166
  %v2314 = vpop.f32.mrb[0].mxu0
  %v2315 = vadd.f32 %v1282, %v2314
  %v2316 = vpop.f32.mrb[0].mxu0
  %v2317 = vpop.f32.mrb[0].mxu0
  %v2318 = vadd.f32 %v1282, %v2317
  %v2319 = vpop.f32.mrb[0].mxu0
  %2320 = vmatprep.mubr.bf16.mxu0 0
  %2321 = vmatmul.mubr.bf16.gmra.mrb[0].mxu0 %v2167
  %v2322 = vpop.f32.mrb[0].mxu0
  %v2323 = vadd.f32 %v1282, %v2322
  %v2324 = vpop.f32.mrb[0].mxu0
  %v2325 = vpop.f32.mrb[0].mxu0
  %v2326 = vadd.f32 %v1282, %v2325
  %v2327 = vpop.f32.mrb[0].mxu0
  %2328 = vdwg.mxu0
  %v2329 = vadd.f32 %v2203, %v956
  %v2330 = vadd.f32 %v2206, %v957
  %v2331 = vadd.f32 %v2211, %v958
  %v2332 = vadd.f32 %v2214, %v959
  %v2333 = vadd.f32 %v2219, %v960
  %v2334 = vadd.f32 %v2222, %v961
  %v2335 = vadd.f32 %v2227, %v962
  %v2336 = vadd.f32 %v2230, %v963
  %v2337 = vadd.f32 %v2235, %v964
  %v2338 = vadd.f32 %v2238, %v965
  %v2339 = vadd.f32 %v2243, %v966
  %v2340 = vadd.f32 %v2246, %v967
  %v2341 = vadd.f32 %v2251, %v968
  %v2342 = vadd.f32 %v2254, %v969
  %v2343 = vadd.f32 %v2259, %v970
  %v2344 = vadd.f32 %v2262, %v971
  %v2345 = vadd.f32 %v2267, %v972
  %v2346 = vadd.f32 %v2270, %v973
  %v2347 = vadd.f32 %v2275, %v974
  %v2348 = vadd.f32 %v2278, %v975
  %v2349 = vadd.f32 %v2283, %v976
  %v2350 = vadd.f32 %v2286, %v977
  %v2351 = vadd.f32 %v2291, %v978
  %v2352 = vadd.f32 %v2294, %v979
  %v2353 = vadd.f32 %v2299, %v980
  %v2354 = vadd.f32 %v2302, %v981
  %v2355 = vadd.f32 %v2307, %v982
  %v2356 = vadd.f32 %v2310, %v983
  %v2357 = vadd.f32 %v2315, %v984
  %v2358 = vadd.f32 %v2318, %v985
  %v2359 = vadd.f32 %v2323, %v986
  %v2360 = vadd.f32 %v2326, %v987
  %v2361 = vmax.f32 %v2329, 0.0
  %v2362 = vmax.f32 %v2330, 0.0
  %v2363 = vmax.f32 %v2331, 0.0
  %v2364 = vmax.f32 %v2332, 0.0
  %v2365 = vmax.f32 %v2333, 0.0
  %v2366 = vmax.f32 %v2334, 0.0
  %v2367 = vmax.f32 %v2335, 0.0
  %v2368 = vmax.f32 %v2336, 0.0
  %v2369 = vmax.f32 %v2337, 0.0
  %v2370 = vmax.f32 %v2338, 0.0
  %v2371 = vmax.f32 %v2339, 0.0
  %v2372 = vmax.f32 %v2340, 0.0
  %v2373 = vmax.f32 %v2341, 0.0
  %v2374 = vmax.f32 %v2342, 0.0
  %v2375 = vmax.f32 %v2343, 0.0
  %v2376 = vmax.f32 %v2344, 0.0
  %v2377 = vmax.f32 %v2345, 0.0
  %v2378 = vmax.f32 %v2346, 0.0
  %v2379 = vmax.f32 %v2347, 0.0
  %v2380 = vmax.f32 %v2348, 0.0
  %v2381 = vmax.f32 %v2349, 0.0
  %v2382 = vmax.f32 %v2350, 0.0
  %v2383 = vmax.f32 %v2351, 0.0
  %v2384 = vmax.f32 %v2352, 0.0
  %v2385 = vmax.f32 %v2353, 0.0
  %v2386 = vmax.f32 %v2354, 0.0
  %v2387 = vmax.f32 %v2355, 0.0
  %v2388 = vmax.f32 %v2356, 0.0
  %v2389 = vmax.f32 %v2357, 0.0
  %v2390 = vmax.f32 %v2358, 0.0
  %v2391 = vmax.f32 %v2359, 0.0
  %v2392 = vmax.f32 %v2360, 0.0
  %v2393 = vpack.c.bf16 %v2362, %v2361
  %v2394 = vpack.c.bf16 %v2364, %v2363
  %v2395 = vpack.c.bf16 %v2366, %v2365
  %v2396 = vpack.c.bf16 %v2368, %v2367
  %v2397 = vpack.c.bf16 %v2370, %v2369
  %v2398 = vpack.c.bf16 %v2372, %v2371
  %v2399 = vpack.c.bf16 %v2374, %v2373
  %v2400 = vpack.c.bf16 %v2376, %v2375
  %v2401 = vpack.c.bf16 %v2378, %v2377
  %v2402 = vpack.c.bf16 %v2380, %v2379
  %v2403 = vpack.c.bf16 %v2382, %v2381
  %v2404 = vpack.c.bf16 %v2384, %v2383
  %v2405 = vpack.c.bf16 %v2386, %v2385
  %v2406 = vpack.c.bf16 %v2388, %v2387
  %v2407 = vpack.c.bf16 %v2390, %v2389
  %v2408 = vpack.c.bf16 %v2392, %v2391
  %v2409 = vld [vmem:[%s8] sm:$0xf]
  %v2410 = vld [vmem:[%s8 + $0x4] sm:$0xf]
  %v2411 = vld [vmem:[%s8 + $0x8] sm:$0xf]
  %v2412 = vld [vmem:[%s8 + $0xc] sm:$0xf]
  %v2413 = vld [vmem:[%s8 + $0x10] sm:$0xf]
  %v2414 = vld [vmem:[%s8 + $0x14] sm:$0xf]
  %v2415 = vld [vmem:[%s8 + $0x18] sm:$0xf]
  %v2416 = vld [vmem:[%s8 + $0x1c] sm:$0xf]
  %v2417 = vld [vmem:[%s8 + $0x20] sm:$0xf]
  %v2418 = vld [vmem:[%s8 + $0x24] sm:$0xf]
  %v2419 = vld [vmem:[%s8 + $0x28] sm:$0xf]
  %v2420 = vld [vmem:[%s8 + $0x2c] sm:$0xf]
  %v2421 = vld [vmem:[%s8 + $0x30] sm:$0xf]
  %v2422 = vld [vmem:[%s8 + $0x34] sm:$0xf]
  %v2423 = vld [vmem:[%s8 + $0x38] sm:$0xf]
  %v2424 = vld [vmem:[%s8 + $0x3c] sm:$0xf]
  %v2425 = vld [vmem:[%s9] sm:$0x1]
  %v2427 = vlaneseq
  %v2428 = vshrl.u32 %v2427, 7
  %v2429 = vsub.s32 0, %v2428
  %v2430 = vrot.slane %v2425, %v2429
  %v2448 = vunpack.c.l.b16 %v2409
  %v2449 = vunpack.c.l.b16 %v2410
  %v2450 = vunpack.c.l.b16 %v2411
  %v2451 = vunpack.c.l.b16 %v2412
  %v2452 = vunpack.c.l.b16 %v2413
  %v2453 = vunpack.c.l.b16 %v2414
  %v2454 = vunpack.c.l.b16 %v2415
  %v2455 = vunpack.c.l.b16 %v2416
  %v2456 = vunpack.c.l.b16 %v2417
  %v2457 = vunpack.c.l.b16 %v2418
  %v2458 = vunpack.c.l.b16 %v2419
  %v2459 = vunpack.c.l.b16 %v2420
  %v2460 = vunpack.c.l.b16 %v2421
  %v2461 = vunpack.c.l.b16 %v2422
  %v2462 = vunpack.c.l.b16 %v2423
  %v2463 = vunpack.c.l.b16 %v2424
  %v2464 = vpack.c.b16 %v2449, %v2448
  %v2465 = vpack.c.b16 %v2451, %v2450
  %v2466 = vpack.c.b16 %v2453, %v2452
  %v2467 = vpack.c.b16 %v2455, %v2454
  %v2468 = vpack.c.b16 %v2457, %v2456
  %v2469 = vpack.c.b16 %v2459, %v2458
  %v2470 = vpack.c.b16 %v2461, %v2460
  %v2471 = vpack.c.b16 %v2463, %v2462
  %2480 = vmatprep.subr.bf16.mxu0 0
  %2481 = vmatpush1.bf16.msra.mxu0 %v2464
  %2482 = vmatprep.subr.bf16.mxu0 0
  %2483 = vmatpush1.bf16.msra.mxu0 %v2465
  %2484 = vmatprep.subr.bf16.mxu0 0
  %2485 = vmatpush1.bf16.msra.mxu0 %v2466
  %2486 = vmatprep.subr.bf16.mxu0 0
  %2487 = vmatpush1.bf16.msra.mxu0 %v2467
  %2488 = vmatprep.subr.bf16.mxu0 0
  %2489 = vmatpush1.bf16.msra.mxu0 %v2468
  %2490 = vmatprep.subr.bf16.mxu0 0
  %2491 = vmatpush1.bf16.msra.mxu0 %v2469
  %2492 = vmatprep.subr.bf16.mxu0 0
  %2493 = vmatpush1.bf16.msra.mxu0 %v2470
  %2494 = vmatprep.subr.bf16.mxu0 0
  %2495 = vmatpush1.bf16.msra.mxu0 %v2471
  %2496 = vmatprep.subr.bf16.mxu0 0
  %2497 = vmatpush1.bf16.msra.mxu0 0
  %2498 = vmatprep.subr.bf16.mxu0 0
  %2499 = vmatpush1.bf16.msra.mxu0 0
  %2500 = vmatprep.subr.bf16.mxu0 0
  %2501 = vmatpush1.bf16.msra.mxu0 0
  %2502 = vmatprep.subr.bf16.mxu0 0
  %2503 = vmatpush1.bf16.msra.mxu0 0
  %2504 = vmatprep.subr.bf16.mxu0 0
  %2505 = vmatpush1.bf16.msra.mxu0 0
  %2506 = vmatprep.subr.bf16.mxu0 0
  %2507 = vmatpush1.bf16.msra.mxu0 0
  %2508 = vmatprep.subr.bf16.mxu0 0
  %2509 = vmatpush1.bf16.msra.mxu0 0
  %2510 = vmatprep.subr.bf16.mxu0 0
  %2511 = vmatpush1.bf16.msra.mxu0 0
  %2512 = vmatprep.mubr.bf16.mxu0 0
  %2513 = vmatmul.mubr.bf16.gmra.mrb[0].mxu0 %v2393
  %v2514 = vpop.f32.mrb[0].mxu0
  %v2515 = vadd.f32 %v2430, %v2514
  %v2516 = vpop.f32.mrb[0].mxu0
  %v2517 = vpop.f32.mrb[0].mxu0
  %v2518 = vadd.f32 %v2430, %v2517
  %v2519 = vpop.f32.mrb[0].mxu0
  %2520 = vmatprep.mubr.bf16.mxu0 0
  %2521 = vmatmul.mubr.bf16.gmra.mrb[0].mxu0 %v2394
  %v2522 = vpop.f32.mrb[0].mxu0
  %v2523 = vadd.f32 %v2430, %v2522
  %v2524 = vpop.f32.mrb[0].mxu0
  %v2525 = vpop.f32.mrb[0].mxu0
  %v2526 = vadd.f32 %v2430, %v2525
  %v2527 = vpop.f32.mrb[0].mxu0
  %2528 = vmatprep.mubr.bf16.mxu0 0
  %2529 = vmatmul.mubr.bf16.gmra.mrb[0].mxu0 %v2395
  %v2530 = vpop.f32.mrb[0].mxu0
  %v2531 = vadd.f32 %v2430, %v2530
  %v2532 = vpop.f32.mrb[0].mxu0
  %v2533 = vpop.f32.mrb[0].mxu0
  %v2534 = vadd.f32 %v2430, %v2533
  %v2535 = vpop.f32.mrb[0].mxu0
  %2536 = vmatprep.mubr.bf16.mxu0 0
  %2537 = vmatmul.mubr.bf16.gmra.mrb[0].mxu0 %v2396
  %v2538 = vpop.f32.mrb[0].mxu0
  %v2539 = vadd.f32 %v2430, %v2538
  %v2540 = vpop.f32.mrb[0].mxu0
  %v2541 = vpop.f32.mrb[0].mxu0
  %v2542 = vadd.f32 %v2430, %v2541
  %v2543 = vpop.f32.mrb[0].mxu0
  %2544 = vmatprep.mubr.bf16.mxu0 0
  %2545 = vmatmul.mubr.bf16.gmra.mrb[0].mxu0 %v2397
  %v2546 = vpop.f32.mrb[0].mxu0
  %v2547 = vadd.f32 %v2430, %v2546
  %v2548 = vpop.f32.mrb[0].mxu0
  %v2549 = vpop.f32.mrb[0].mxu0
  %v2550 = vadd.f32 %v2430, %v2549
  %v2551 = vpop.f32.mrb[0].mxu0
  %2552 = vmatprep.mubr.bf16.mxu0 0
  %2553 = vmatmul.mubr.bf16.gmra.mrb[0].mxu0 %v2398
  %v2554 = vpop.f32.mrb[0].mxu0
  %v2555 = vadd.f32 %v2430, %v2554
  %v2556 = vpop.f32.mrb[0].mxu0
  %v2557 = vpop.f32.mrb[0].mxu0
  %v2558 = vadd.f32 %v2430, %v2557
  %v2559 = vpop.f32.mrb[0].mxu0
  %2560 = vmatprep.mubr.bf16.mxu0 0
  %2561 = vmatmul.mubr.bf16.gmra.mrb[0].mxu0 %v2399
  %v2562 = vpop.f32.mrb[0].mxu0
  %v2563 = vadd.f32 %v2430, %v2562
  %v2564 = vpop.f32.mrb[0].mxu0
  %v2565 = vpop.f32.mrb[0].mxu0
  %v2566 = vadd.f32 %v2430, %v2565
  %v2567 = vpop.f32.mrb[0].mxu0
  %2568 = vmatprep.mubr.bf16.mxu0 0
  %2569 = vmatmul.mubr.bf16.gmra.mrb[0].mxu0 %v2400
  %v2570 = vpop.f32.mrb[0].mxu0
  %v2571 = vadd.f32 %v2430, %v2570
  %v2572 = vpop.f32.mrb[0].mxu0
  %v2573 = vpop.f32.mrb[0].mxu0
  %v2574 = vadd.f32 %v2430, %v2573
  %v2575 = vpop.f32.mrb[0].mxu0
  %2576 = vmatprep.mubr.bf16.mxu0 0
  %2577 = vmatmul.mubr.bf16.gmra.mrb[0].mxu0 %v2401
  %v2578 = vpop.f32.mrb[0].mxu0
  %v2579 = vadd.f32 %v2430, %v2578
  %v2580 = vpop.f32.mrb[0].mxu0
  %v2581 = vpop.f32.mrb[0].mxu0
  %v2582 = vadd.f32 %v2430, %v2581
  %v2583 = vpop.f32.mrb[0].mxu0
  %2584 = vmatprep.mubr.bf16.mxu0 0
  %2585 = vmatmul.mubr.bf16.gmra.mrb[0].mxu0 %v2402
  %v2586 = vpop.f32.mrb[0].mxu0
  %v2587 = vadd.f32 %v2430, %v2586
  %v2588 = vpop.f32.mrb[0].mxu0
  %v2589 = vpop.f32.mrb[0].mxu0
  %v2590 = vadd.f32 %v2430, %v2589
  %v2591 = vpop.f32.mrb[0].mxu0
  %2592 = vmatprep.mubr.bf16.mxu0 0
  %2593 = vmatmul.mubr.bf16.gmra.mrb[0].mxu0 %v2403
  %v2594 = vpop.f32.mrb[0].mxu0
  %v2595 = vadd.f32 %v2430, %v2594
  %v2596 = vpop.f32.mrb[0].mxu0
  %v2597 = vpop.f32.mrb[0].mxu0
  %v2598 = vadd.f32 %v2430, %v2597
  %v2599 = vpop.f32.mrb[0].mxu0
  %2600 = vmatprep.mubr.bf16.mxu0 0
  %2601 = vmatmul.mubr.bf16.gmra.mrb[0].mxu0 %v2404
  %v2602 = vpop.f32.mrb[0].mxu0
  %v2603 = vadd.f32 %v2430, %v2602
  %v2604 = vpop.f32.mrb[0].mxu0
  %v2605 = vpop.f32.mrb[0].mxu0
  %v2606 = vadd.f32 %v2430, %v2605
  %v2607 = vpop.f32.mrb[0].mxu0
  %2608 = vmatprep.mubr.bf16.mxu0 0
  %2609 = vmatmul.mubr.bf16.gmra.mrb[0].mxu0 %v2405
  %v2610 = vpop.f32.mrb[0].mxu0
  %v2611 = vadd.f32 %v2430, %v2610
  %v2612 = vpop.f32.mrb[0].mxu0
  %v2613 = vpop.f32.mrb[0].mxu0
  %v2614 = vadd.f32 %v2430, %v2613
  %v2615 = vpop.f32.mrb[0].mxu0
  %2616 = vmatprep.mubr.bf16.mxu0 0
  %2617 = vmatmul.mubr.bf16.gmra.mrb[0].mxu0 %v2406
  %v2618 = vpop.f32.mrb[0].mxu0
  %v2619 = vadd.f32 %v2430, %v2618
  %v2620 = vpop.f32.mrb[0].mxu0
  %v2621 = vpop.f32.mrb[0].mxu0
  %v2622 = vadd.f32 %v2430, %v2621
  %v2623 = vpop.f32.mrb[0].mxu0
  %2624 = vmatprep.mubr.bf16.mxu0 0
  %2625 = vmatmul.mubr.bf16.gmra.mrb[0].mxu0 %v2407
  %v2626 = vpop.f32.mrb[0].mxu0
  %v2627 = vadd.f32 %v2430, %v2626
  %v2628 = vpop.f32.mrb[0].mxu0
  %v2629 = vpop.f32.mrb[0].mxu0
  %v2630 = vadd.f32 %v2430, %v2629
  %v2631 = vpop.f32.mrb[0].mxu0
  %2632 = vmatprep.mubr.bf16.mxu0 0
  %2633 = vmatmul.mubr.bf16.gmra.mrb[0].mxu0 %v2408
  %v2634 = vpop.f32.mrb[0].mxu0
  %v2635 = vadd.f32 %v2430, %v2634
  %v2636 = vpop.f32.mrb[0].mxu0
  %v2637 = vpop.f32.mrb[0].mxu0
  %v2638 = vadd.f32 %v2430, %v2637
  %v2639 = vpop.f32.mrb[0].mxu0
  %2640 = vdwg.mxu0
  %v2641 = vmax.f32 %v2515, 0.0
  %v2642 = vmax.f32 %v2518, 0.0
  %v2643 = vmax.f32 %v2523, 0.0
  %v2644 = vmax.f32 %v2526, 0.0
  %v2645 = vmax.f32 %v2531, 0.0
  %v2646 = vmax.f32 %v2534, 0.0
  %v2647 = vmax.f32 %v2539, 0.0
  %v2648 = vmax.f32 %v2542, 0.0
  %v2649 = vmax.f32 %v2547, 0.0
  %v2650 = vmax.f32 %v2550, 0.0
  %v2651 = vmax.f32 %v2555, 0.0
  %v2652 = vmax.f32 %v2558, 0.0
  %v2653 = vmax.f32 %v2563, 0.0
  %v2654 = vmax.f32 %v2566, 0.0
  %v2655 = vmax.f32 %v2571, 0.0
  %v2656 = vmax.f32 %v2574, 0.0
  %v2657 = vmax.f32 %v2579, 0.0
  %v2658 = vmax.f32 %v2582, 0.0
  %v2659 = vmax.f32 %v2587, 0.0
  %v2660 = vmax.f32 %v2590, 0.0
  %v2661 = vmax.f32 %v2595, 0.0
  %v2662 = vmax.f32 %v2598, 0.0
  %v2663 = vmax.f32 %v2603, 0.0
  %v2664 = vmax.f32 %v2606, 0.0
  %v2665 = vmax.f32 %v2611, 0.0
  %v2666 = vmax.f32 %v2614, 0.0
  %v2667 = vmax.f32 %v2619, 0.0
  %v2668 = vmax.f32 %v2622, 0.0
  %v2669 = vmax.f32 %v2627, 0.0
  %v2670 = vmax.f32 %v2630, 0.0
  %v2671 = vmax.f32 %v2635, 0.0
  %v2672 = vmax.f32 %v2638, 0.0
  %2673 = vst [vmem:[%s10] sm:$0xff] %v2641
  %2674 = vst [vmem:[%s10 + $0x8] sm:$0xff] %v2642
  %2675 = vst [vmem:[%s10 + $0x10] sm:$0xff] %v2643
  %2676 = vst [vmem:[%s10 + $0x18] sm:$0xff] %v2644
  %2677 = vst [vmem:[%s10 + $0x20] sm:$0xff] %v2645
  %2678 = vst [vmem:[%s10 + $0x28] sm:$0xff] %v2646
  %2679 = vst [vmem:[%s10 + $0x30] sm:$0xff] %v2647
  %2680 = vst [vmem:[%s10 + $0x38] sm:$0xff] %v2648
  %2681 = vst [vmem:[%s10 + $0x40] sm:$0xff] %v2649
  %2682 = vst [vmem:[%s10 + $0x48] sm:$0xff] %v2650
  %2683 = vst [vmem:[%s10 + $0x50] sm:$0xff] %v2651
  %2684 = vst [vmem:[%s10 + $0x58] sm:$0xff] %v2652
  %2685 = vst [vmem:[%s10 + $0x60] sm:$0xff] %v2653
  %2686 = vst [vmem:[%s10 + $0x68] sm:$0xff] %v2654
  %2687 = vst [vmem:[%s10 + $0x70] sm:$0xff] %v2655
  %2688 = vst [vmem:[%s10 + $0x78] sm:$0xff] %v2656
  %2689 = vst [vmem:[%s10 + $0x80] sm:$0xff] %v2657
  %2690 = vst [vmem:[%s10 + $0x88] sm:$0xff] %v2658
  %2691 = vst [vmem:[%s10 + $0x90] sm:$0xff] %v2659
  %2692 = vst [vmem:[%s10 + $0x98] sm:$0xff] %v2660
  %2693 = vst [vmem:[%s10 + $0xa0] sm:$0xff] %v2661
  %2694 = vst [vmem:[%s10 + $0xa8] sm:$0xff] %v2662
  %2695 = vst [vmem:[%s10 + $0xb0] sm:$0xff] %v2663
  %2696 = vst [vmem:[%s10 + $0xb8] sm:$0xff] %v2664
  %2697 = vst [vmem:[%s10 + $0xc0] sm:$0xff] %v2665
  %2698 = vst [vmem:[%s10 + $0xc8] sm:$0xff] %v2666
  %2699 = vst [vmem:[%s10 + $0xd0] sm:$0xff] %v2667
  %2700 = vst [vmem:[%s10 + $0xd8] sm:$0xff] %v2668
  %2701 = vst [vmem:[%s10 + $0xe0] sm:$0xff] %v2669
  %2702 = vst [vmem:[%s10 + $0xe8] sm:$0xff] %v2670
  %2703 = vst [vmem:[%s10 + $0xf0] sm:$0xff] %v2671
  %2704 = vst [vmem:[%s10 + $0xf8] sm:$0xff] %v2672
  // Predicated region
  $region42: #{embed_mean_field.1} parent=0 // pred_check
    _
  $region43: #{embed_mean_field.1} parent=0 // pred_check_branch
    %2706 = sbr.rel (0) target = $region45
  $region44: #{embed_mean_field.1} parent=0 // pred_region
    _
  $region45: #{embed_mean_field.1} parent=0 // pred_fallthru
    _
  // Predicated region
  $region46: #{embed_mean_field.1} parent=0 // pred_check
    _
  $region47: #{embed_mean_field.1} parent=0 // pred_check_branch
    %2708 = sbr.rel (0) target = $region49
  $region48: #{embed_mean_field.1} parent=0 // pred_region
    _
  $region49: #{embed_mean_field.1} parent=0 // pred_fallthru
    _

</llo_original>
